<compile_context>
chip_gen: v7x
topology: tpu7x:2x2x1
jax: 0.10.0
libtpu: 0.0.40
codegen_flags: <defaults>
</compile_context>

<pallas_src>
import functools

import jax
import jax.numpy as jnp
import numpy as np
from jax.experimental import pallas as pl
from jax.experimental.pallas import tpu as pltpu


# ----------------------------------------------------------------------------
# Fused kernel: one grid step == one image.
# ----------------------------------------------------------------------------
def _fused_attention_kernel(
    x_ref, wt_ref, bt_ref, w1_ref, b1_ref, w2_ref, b2_ref, ws_ref, bs_ref,
    o_ref, *scratch, H, W, kt, pt, share_trunk,
):
    """Refs (per image; channels on sublanes, flattened spatial on lanes):
      x_ref  : (1, Cin,  H*W)                   input image (NCHW, flattened)
      wt/bt  : (Cout, kt*kt*Cin), (Cout, 1)     trunk conv (MCNN_layer)
      w1/b1  : (Cout, 9*Cin),     (Cout, 1)     residual conv1 (3x3, pad 1)
      w2/b2  : (Cout, 9*Cout),    (Cout, 1)     residual conv2 (3x3, pad 1)
      ws/bs  : (Cout, Cin),       (Cout, 1)     residual 1x1 shortcut
      o_ref  : (1, Cout, H*W)
    Scratch: zero-extended flat activations + im2col matrices (VMEM).
    """
    if share_trunk:
        ext1_ref, col1_ref, ext2_ref, col2_ref = scratch
    else:
        ext1_ref, col1_ref, ext2_ref, col2_ref, extt_ref, colt_ref = scratch

    f32 = jnp.float32
    S = H * W
    # Column index of every flattened pixel (masks horizontal-wrap taps).
    col_idx = jax.lax.broadcasted_iota(jnp.int32, (1, S), 1) % W

    def build_col(src, ext_ref, col_ref, k, p):
        """im2col of a stride-1 'same' k x k conv on a flat (C, H*W) activation."""
        C = src.shape[0]
        L = p * W + p                     # largest |flat shift| of any tap
        P = ext_ref.shape[1] - S - L      # lane-aligned zero prefix length
        ext_ref[...] = jnp.zeros_like(ext_ref)
        ext_ref[:, P:P + S] = src
        for ih in range(k):
            for iw in range(k):
                dh, dw = ih - p, iw - p
                start = P + dh * W + dw
                tap = ext_ref[:, start:start + S]          # (C, S)
                if dw != 0:
                    ok = (col_idx + dw >= 0) & (col_idx + dw < W)
                    tap = jnp.where(ok, tap, 0.0)
                r = (ih * k + iw) * C
                col_ref[r:r + C, :] = tap
        return col_ref[...]

    x = x_ref[0].astype(f32)                               # (Cin, S)

    # im2col for the 3x3 / pad=1 residual convs; the trunk reuses it when it
    # has the same geometry (ksize=3, padding=1).
    col1 = build_col(x, ext1_ref, col1_ref, 3, 1)          # (9*Cin, S)
    col_t = col1 if share_trunk else build_col(x, extt_ref, colt_ref, kt, pt)

    # ---- trunk branch: MCNN_layer = conv(ksize, pad, stride=1) + ReLU -------
    trunk = jnp.dot(wt_ref[...].astype(f32), col_t,
                    preferred_element_type=f32) + bt_ref[...].astype(f32)
    trunk = jnp.maximum(trunk, 0.0)                        # (Cout, S)

    # ---- residual branch: conv3x3 + ReLU -> conv3x3, plus 1x1 shortcut ------
    h1 = jnp.dot(w1_ref[...].astype(f32), col1,
                 preferred_element_type=f32) + b1_ref[...].astype(f32)
    h1 = jnp.maximum(h1, 0.0)                              # (Cout, S)

    col2 = build_col(h1, ext2_ref, col2_ref, 3, 1)         # (9*Cout, S)
    h2 = jnp.dot(w2_ref[...].astype(f32), col2,
                 preferred_element_type=f32) + b2_ref[...].astype(f32)
    sc = jnp.dot(ws_ref[...].astype(f32), x,
                 preferred_element_type=f32) + bs_ref[...].astype(f32)
    res = h2 + sc

    # ---- attention combine: out = (1 + sigmoid(res)) * trunk ----------------
    o_ref[0] = ((1.0 + jax.nn.sigmoid(res)) * trunk).astype(o_ref.dtype)


# ----------------------------------------------------------------------------
# Wrapper: reshapes (free, no transposes), weight flattening, pallas_call.
# ----------------------------------------------------------------------------
def attention_stage5_forward(params, x_nchw, *, ksize, padding, stride):
    N, Cin, H, W = x_nchw.shape
    Cout = params["trunk_b"].shape[0]
    if stride != 1 or 2 * padding != ksize - 1:
        raise ValueError(
            "Attention_stage5 requires the trunk conv to preserve spatial size "
            "(stride=1, padding=ksize//2) so it can be combined with the "
            "residual branch.")

    S = H * W
    kt, pt = ksize, padding
    share_trunk = (kt == 3 and pt == 1)

    def w2d(w_hwio):  # (kh, kw, ci, co) -> (co, kh*kw*ci), row order (kh, kw, ci)
        kh, kw, ci, co = w_hwio.shape
        return jnp.transpose(w_hwio.reshape(kh * kw * ci, co))

    def b2d(b):
        return b.reshape(-1, 1)

    def ext_width(p):
        L = p * W + p
        P = 0 if L == 0 else ((L + 127) // 128) * 128
        return P + S + L

    x_flat = x_nchw.reshape(N, Cin, S)  # free reshape of NCHW

    scratch = [
        pltpu.VMEM((Cin, ext_width(1)), jnp.float32),    # zero-extended x (3x3 convs)
        pltpu.VMEM((9 * Cin, S), jnp.float32),           # im2col of x (3x3, pad 1)
        pltpu.VMEM((Cout, ext_width(1)), jnp.float32),   # zero-extended h1
        pltpu.VMEM((9 * Cout, S), jnp.float32),          # im2col of h1 (3x3, pad 1)
    ]
    if not share_trunk:
        scratch += [
            pltpu.VMEM((Cin, ext_width(pt)), jnp.float32),
            pltpu.VMEM((kt * kt * Cin, S), jnp.float32),
        ]

    kernel = functools.partial(
        _fused_attention_kernel, H=H, W=W, kt=kt, pt=pt, share_trunk=share_trunk)

    def wspec(shape):
        return pl.BlockSpec(shape, lambda n: (0, 0))

    out_flat = pl.pallas_call(
        kernel,
        out_shape=jax.ShapeDtypeStruct((N, Cout, S), x_nchw.dtype),
        grid=(N,),
        in_specs=[
            pl.BlockSpec((1, Cin, S), lambda n: (n, 0, 0)),
            wspec((Cout, kt * kt * Cin)), wspec((Cout, 1)),
            wspec((Cout, 9 * Cin)), wspec((Cout, 1)),
            wspec((Cout, 9 * Cout)), wspec((Cout, 1)),
            wspec((Cout, Cin)), wspec((Cout, 1)),
        ],
        out_specs=pl.BlockSpec((1, Cout, S), lambda n: (n, 0, 0)),
        scratch_shapes=scratch,
        compiler_params=pltpu.CompilerParams(
            dimension_semantics=("parallel",)),
    )(
        x_flat,
        w2d(params["trunk_w"]), b2d(params["trunk_b"]),
        w2d(params["res_w1"]), b2d(params["res_b1"]),
        w2d(params["res_w2"]), b2d(params["res_b2"]),
        w2d(params["res_ws"]), b2d(params["res_bs"]),
    )
    return out_flat.reshape(N, Cout, H, W)


# ----------------------------------------------------------------------------
# Parameter init (weights kept in HWIO).
# ----------------------------------------------------------------------------
def init_params(key, in_channels, out_channels, ksize):
    ks = jax.random.split(key, 8)
    s = 0.1

    def w(k, shape):
        return (s * jax.random.normal(k, shape)).astype(jnp.float32)

    return {
        # MCNN_layer (trunk): conv ksize + ReLU
        "trunk_w": w(ks[0], (ksize, ksize, in_channels, out_channels)),
        "trunk_b": w(ks[1], (out_channels,)),
        # ResidualBlock2: conv3x3 -> ReLU -> conv3x3, plus 1x1 shortcut
        "res_w1": w(ks[2], (3, 3, in_channels, out_channels)),
        "res_b1": w(ks[3], (out_channels,)),
        "res_w2": w(ks[4], (3, 3, out_channels, out_channels)),
        "res_b2": w(ks[5], (out_channels,)),
        "res_ws": w(ks[6], (1, 1, in_channels, out_channels)),
        "res_bs": w(ks[7], (out_channels,)),
    }


# ----------------------------------------------------------------------------
# Pure-JAX reference (correctness sanity check).
# ----------------------------------------------------------------------------
def _conv_ref(x_nchw, w_hwio, b, stride, padding, relu):
    out = jax.lax.conv_general_dilated(
        x_nchw, w_hwio, (stride, stride),
        [(padding, padding), (padding, padding)],
        dimension_numbers=("NCHW", "HWIO", "NCHW"),
    ) + b.reshape(1, -1, 1, 1)
    return jnp.maximum(out, 0.0) if relu else out


def reference_forward(params, x_nchw, *, ksize, padding, stride):
    trunk = _conv_ref(x_nchw, params["trunk_w"], params["trunk_b"], stride, padding, True)
    h1 = _conv_ref(x_nchw, params["res_w1"], params["res_b1"], 1, 1, True)
    h2 = _conv_ref(h1, params["res_w2"], params["res_b2"], 1, 1, False)
    sc = _conv_ref(x_nchw, params["res_ws"], params["res_bs"], 1, 0, False)
    res = h2 + sc
    return (1.0 + jax.nn.sigmoid(res)) * trunk


if __name__ == "__main__":
    in_channels, out_channels = 4, 8
    ksize, padding, stride = 3, 1, 1
    N, H, W = 2, 16, 16

    key = jax.random.PRNGKey(0)
    k_param, k_x = jax.random.split(key)
    params = init_params(k_param, in_channels, out_channels, ksize)
    x = jax.random.normal(k_x, (N, in_channels, H, W), dtype=jnp.float32)

    fwd = jax.jit(functools.partial(
        attention_stage5_forward, ksize=ksize, padding=padding, stride=stride))
    out = fwd(params, x)
    out = jax.block_until_ready(out)

    ref = reference_forward(params, x, ksize=ksize, padding=padding, stride=stride)
    np.testing.assert_allclose(np.asarray(out), np.asarray(ref), atol=1e-4, rtol=1e-4)

    print("KERNEL_OK")
</pallas_src>

<mosaic_0001>
module attributes {stable_mosaic.version = 11 : i64} {
  func.func @_fused_attention_kernel(%arg0: i32, %arg1: memref<1x4x256xf32, #tpu.memory_space<vmem>>, %arg2: memref<8x36xf32, #tpu.memory_space<vmem>>, %arg3: memref<8x1xf32, #tpu.memory_space<vmem>>, %arg4: memref<8x36xf32, #tpu.memory_space<vmem>>, %arg5: memref<8x1xf32, #tpu.memory_space<vmem>>, %arg6: memref<8x72xf32, #tpu.memory_space<vmem>>, %arg7: memref<8x1xf32, #tpu.memory_space<vmem>>, %arg8: memref<8x4xf32, #tpu.memory_space<vmem>>, %arg9: memref<8x1xf32, #tpu.memory_space<vmem>>, %arg10: memref<1x8x256xf32, #tpu.memory_space<vmem>>, %arg11: memref<4x401xf32, #tpu.memory_space<vmem>>, %arg12: memref<36x256xf32, #tpu.memory_space<vmem>>, %arg13: memref<8x401xf32, #tpu.memory_space<vmem>>, %arg14: memref<72x256xf32, #tpu.memory_space<vmem>>) attributes {dimension_semantics = [#tpu.dimension_semantics<parallel>], iteration_bounds = array<i64: 2>, scalar_prefetch = 0 : i64, scratch_operands = 4 : i64, tpu.core_type = #tpu.core_type<tc>, window_params = [{transform_indices = @transform_0, window_bounds = array<i64: 1, 4, 256>}, {pipeline_mode = #tpu.pipeline_mode<synchronous>, transform_indices = @transform_1, window_bounds = array<i64: 8, 36>}, {pipeline_mode = #tpu.pipeline_mode<synchronous>, transform_indices = @transform_2, window_bounds = array<i64: 8, 1>}, {pipeline_mode = #tpu.pipeline_mode<synchronous>, transform_indices = @transform_3, window_bounds = array<i64: 8, 36>}, {pipeline_mode = #tpu.pipeline_mode<synchronous>, transform_indices = @transform_4, window_bounds = array<i64: 8, 1>}, {pipeline_mode = #tpu.pipeline_mode<synchronous>, transform_indices = @transform_5, window_bounds = array<i64: 8, 72>}, {pipeline_mode = #tpu.pipeline_mode<synchronous>, transform_indices = @transform_6, window_bounds = array<i64: 8, 1>}, {pipeline_mode = #tpu.pipeline_mode<synchronous>, transform_indices = @transform_7, window_bounds = array<i64: 8, 4>}, {pipeline_mode = #tpu.pipeline_mode<synchronous>, transform_indices = @transform_8, window_bounds = array<i64: 8, 1>}, {transform_indices = @transform_9, window_bounds = array<i64: 1, 8, 256>}]} {
    %0 = tpu.iota {dimensions = array<i32: 1>} : vector<1x256xi32>
    %c16_i32 = arith.constant 16 : i32
    %c0_i32 = arith.constant 0 : i32
    %1 = arith.cmpi eq, %c16_i32, %c0_i32 : i32
    %c1_i32 = arith.constant 1 : i32
    %2 = arith.select %1, %c1_i32, %c16_i32 : i32
    %3 = vector.broadcast %2 : i32 to vector<1x256xi32>
    %4 = arith.remsi %0, %3 : vector<1x256xi32>
    %c0_i32_0 = arith.constant 0 : i32
    %5 = vector.broadcast %c0_i32_0 : i32 to vector<1x256xi32>
    %6 = arith.cmpi ne, %4, %5 : vector<1x256xi32>
    %c0_i32_1 = arith.constant 0 : i32
    %7 = vector.broadcast %c0_i32_1 : i32 to vector<1x256xi32>
    %8 = arith.cmpi slt, %4, %7 : vector<1x256xi32>
    %c0_i32_2 = arith.constant 0 : i32
    %9 = arith.cmpi slt, %2, %c0_i32_2 : i32
    %10 = vector.broadcast %9 : i1 to vector<1x256xi1>
    %11 = vector.broadcast %10 : vector<1x256xi1> to vector<1x256xi1>
    %12 = arith.xori %8, %11 : vector<1x256xi1>
    %13 = arith.andi %12, %6 : vector<1x256xi1>
    %14 = vector.broadcast %2 : i32 to vector<1x256xi32>
    %15 = arith.addi %4, %14 : vector<1x256xi32>
    %16 = arith.select %13, %15, %4 : vector<1x256xi1>, vector<1x256xi32>
    %c0 = arith.constant 0 : index
    %c0_3 = arith.constant 0 : index
    %c0_4 = arith.constant 0 : index
    %17 = vector.load %arg1[%c0, %c0_3, %c0_4] : memref<1x4x256xf32, #tpu.memory_space<vmem>>, vector<1x4x256xf32>
    %18 = vector.shape_cast %17 : vector<1x4x256xf32> to vector<4x256xf32>
    %cst = arith.constant 0.000000e+00 : f32
    %19 = vector.broadcast %cst : f32 to vector<4x401xf32>
    %c0_5 = arith.constant 0 : index
    %c0_6 = arith.constant 0 : index
    %20 = vector.load %arg11[%c0_5, %c0_6] : memref<4x401xf32, #tpu.memory_space<vmem>>, vector<4x401xf32>
    tpu.vector_store %arg11[%c0_5, %c0_6], %19 {strides = array<i32>} : memref<4x401xf32, #tpu.memory_space<vmem>>, vector<4x401xf32>,
    %c0_7 = arith.constant 0 : index
    %c128 = arith.constant 128 : index
    %21 = vector.load %arg11[%c0_7, %c128] : memref<4x401xf32, #tpu.memory_space<vmem>>, vector<4x256xf32>
    tpu.vector_store %arg11[%c0_7, %c128], %18 {strides = array<i32>} : memref<4x401xf32, #tpu.memory_space<vmem>>, vector<4x256xf32>,
    %c0_8 = arith.constant 0 : index
    %c111 = arith.constant 111 : index
    %22 = vector.load %arg11[%c0_8, %c111] : memref<4x401xf32, #tpu.memory_space<vmem>>, vector<4x256xf32>
    %c-1_i32 = arith.constant -1 : i32
    %23 = vector.broadcast %c-1_i32 : i32 to vector<1x256xi32>
    %24 = arith.addi %16, %23 : vector<1x256xi32>
    %c0_i32_9 = arith.constant 0 : i32
    %25 = vector.broadcast %c0_i32_9 : i32 to vector<1x256xi32>
    %26 = arith.cmpi sge, %24, %25 : vector<1x256xi32>
    %c-1_i32_10 = arith.constant -1 : i32
    %27 = vector.broadcast %c-1_i32_10 : i32 to vector<1x256xi32>
    %28 = arith.addi %16, %27 : vector<1x256xi32>
    %c16_i32_11 = arith.constant 16 : i32
    %29 = vector.broadcast %c16_i32_11 : i32 to vector<1x256xi32>
    %30 = arith.cmpi slt, %28, %29 : vector<1x256xi32>
    %31 = arith.andi %26, %30 : vector<1x256xi1>
    %cst_12 = arith.constant 0.000000e+00 : f32
    %32 = vector.shape_cast %31 : vector<1x256xi1> to vector<1x256xi1>
    %33 = vector.broadcast %32 : vector<1x256xi1> to vector<4x256xi1>
    %34 = vector.broadcast %cst_12 : f32 to vector<4x256xf32>
    %35 = arith.select %33, %22, %34 : vector<4x256xi1>, vector<4x256xf32>
    %c0_13 = arith.constant 0 : index
    %c0_14 = arith.constant 0 : index
    %36 = vector.load %arg12[%c0_13, %c0_14] : memref<36x256xf32, #tpu.memory_space<vmem>>, vector<4x256xf32>
    tpu.vector_store %arg12[%c0_13, %c0_14], %35 {strides = array<i32>} : memref<36x256xf32, #tpu.memory_space<vmem>>, vector<4x256xf32>,
    %c0_15 = arith.constant 0 : index
    %c112 = arith.constant 112 : index
    %37 = vector.load %arg11[%c0_15, %c112] : memref<4x401xf32, #tpu.memory_space<vmem>>, vector<4x256xf32>
    %c4 = arith.constant 4 : index
    %c0_16 = arith.constant 0 : index
    %38 = vector.load %arg12[%c4, %c0_16] : memref<36x256xf32, #tpu.memory_space<vmem>>, vector<4x256xf32>
    tpu.vector_store %arg12[%c4, %c0_16], %37 {strides = array<i32>} : memref<36x256xf32, #tpu.memory_space<vmem>>, vector<4x256xf32>,
    %c0_17 = arith.constant 0 : index
    %c113 = arith.constant 113 : index
    %39 = vector.load %arg11[%c0_17, %c113] : memref<4x401xf32, #tpu.memory_space<vmem>>, vector<4x256xf32>
    %c1_i32_18 = arith.constant 1 : i32
    %40 = vector.broadcast %c1_i32_18 : i32 to vector<1x256xi32>
    %41 = arith.addi %16, %40 : vector<1x256xi32>
    %c0_i32_19 = arith.constant 0 : i32
    %42 = vector.broadcast %c0_i32_19 : i32 to vector<1x256xi32>
    %43 = arith.cmpi sge, %41, %42 : vector<1x256xi32>
    %c1_i32_20 = arith.constant 1 : i32
    %44 = vector.broadcast %c1_i32_20 : i32 to vector<1x256xi32>
    %45 = arith.addi %16, %44 : vector<1x256xi32>
    %c16_i32_21 = arith.constant 16 : i32
    %46 = vector.broadcast %c16_i32_21 : i32 to vector<1x256xi32>
    %47 = arith.cmpi slt, %45, %46 : vector<1x256xi32>
    %48 = arith.andi %43, %47 : vector<1x256xi1>
    %cst_22 = arith.constant 0.000000e+00 : f32
    %49 = vector.shape_cast %48 : vector<1x256xi1> to vector<1x256xi1>
    %50 = vector.broadcast %49 : vector<1x256xi1> to vector<4x256xi1>
    %51 = vector.broadcast %cst_22 : f32 to vector<4x256xf32>
    %52 = arith.select %50, %39, %51 : vector<4x256xi1>, vector<4x256xf32>
    %c8 = arith.constant 8 : index
    %c0_23 = arith.constant 0 : index
    %53 = vector.load %arg12[%c8, %c0_23] : memref<36x256xf32, #tpu.memory_space<vmem>>, vector<4x256xf32>
    tpu.vector_store %arg12[%c8, %c0_23], %52 {strides = array<i32>} : memref<36x256xf32, #tpu.memory_space<vmem>>, vector<4x256xf32>,
    %c0_24 = arith.constant 0 : index
    %c127 = arith.constant 127 : index
    %54 = vector.load %arg11[%c0_24, %c127] : memref<4x401xf32, #tpu.memory_space<vmem>>, vector<4x256xf32>
    %c-1_i32_25 = arith.constant -1 : i32
    %55 = vector.broadcast %c-1_i32_25 : i32 to vector<1x256xi32>
    %56 = arith.addi %16, %55 : vector<1x256xi32>
    %c0_i32_26 = arith.constant 0 : i32
    %57 = vector.broadcast %c0_i32_26 : i32 to vector<1x256xi32>
    %58 = arith.cmpi sge, %56, %57 : vector<1x256xi32>
    %c-1_i32_27 = arith.constant -1 : i32
    %59 = vector.broadcast %c-1_i32_27 : i32 to vector<1x256xi32>
    %60 = arith.addi %16, %59 : vector<1x256xi32>
    %c16_i32_28 = arith.constant 16 : i32
    %61 = vector.broadcast %c16_i32_28 : i32 to vector<1x256xi32>
    %62 = arith.cmpi slt, %60, %61 : vector<1x256xi32>
    %63 = arith.andi %58, %62 : vector<1x256xi1>
    %cst_29 = arith.constant 0.000000e+00 : f32
    %64 = vector.shape_cast %63 : vector<1x256xi1> to vector<1x256xi1>
    %65 = vector.broadcast %64 : vector<1x256xi1> to vector<4x256xi1>
    %66 = vector.broadcast %cst_29 : f32 to vector<4x256xf32>
    %67 = arith.select %65, %54, %66 : vector<4x256xi1>, vector<4x256xf32>
    %c12 = arith.constant 12 : index
    %c0_30 = arith.constant 0 : index
    %68 = vector.load %arg12[%c12, %c0_30] : memref<36x256xf32, #tpu.memory_space<vmem>>, vector<4x256xf32>
    tpu.vector_store %arg12[%c12, %c0_30], %67 {strides = array<i32>} : memref<36x256xf32, #tpu.memory_space<vmem>>, vector<4x256xf32>,
    %c0_31 = arith.constant 0 : index
    %c128_32 = arith.constant 128 : index
    %69 = vector.load %arg11[%c0_31, %c128_32] : memref<4x401xf32, #tpu.memory_space<vmem>>, vector<4x256xf32>
    %c16 = arith.constant 16 : index
    %c0_33 = arith.constant 0 : index
    %70 = vector.load %arg12[%c16, %c0_33] : memref<36x256xf32, #tpu.memory_space<vmem>>, vector<4x256xf32>
    tpu.vector_store %arg12[%c16, %c0_33], %69 {strides = array<i32>} : memref<36x256xf32, #tpu.memory_space<vmem>>, vector<4x256xf32>,
    %c0_34 = arith.constant 0 : index
    %c129 = arith.constant 129 : index
    %71 = vector.load %arg11[%c0_34, %c129] : memref<4x401xf32, #tpu.memory_space<vmem>>, vector<4x256xf32>
    %c1_i32_35 = arith.constant 1 : i32
    %72 = vector.broadcast %c1_i32_35 : i32 to vector<1x256xi32>
    %73 = arith.addi %16, %72 : vector<1x256xi32>
    %c0_i32_36 = arith.constant 0 : i32
    %74 = vector.broadcast %c0_i32_36 : i32 to vector<1x256xi32>
    %75 = arith.cmpi sge, %73, %74 : vector<1x256xi32>
    %c1_i32_37 = arith.constant 1 : i32
    %76 = vector.broadcast %c1_i32_37 : i32 to vector<1x256xi32>
    %77 = arith.addi %16, %76 : vector<1x256xi32>
    %c16_i32_38 = arith.constant 16 : i32
    %78 = vector.broadcast %c16_i32_38 : i32 to vector<1x256xi32>
    %79 = arith.cmpi slt, %77, %78 : vector<1x256xi32>
    %80 = arith.andi %75, %79 : vector<1x256xi1>
    %cst_39 = arith.constant 0.000000e+00 : f32
    %81 = vector.shape_cast %80 : vector<1x256xi1> to vector<1x256xi1>
    %82 = vector.broadcast %81 : vector<1x256xi1> to vector<4x256xi1>
    %83 = vector.broadcast %cst_39 : f32 to vector<4x256xf32>
    %84 = arith.select %82, %71, %83 : vector<4x256xi1>, vector<4x256xf32>
    %c20 = arith.constant 20 : index
    %c0_40 = arith.constant 0 : index
    %85 = vector.load %arg12[%c20, %c0_40] : memref<36x256xf32, #tpu.memory_space<vmem>>, vector<4x256xf32>
    tpu.vector_store %arg12[%c20, %c0_40], %84 {strides = array<i32>} : memref<36x256xf32, #tpu.memory_space<vmem>>, vector<4x256xf32>,
    %c0_41 = arith.constant 0 : index
    %c143 = arith.constant 143 : index
    %86 = vector.load %arg11[%c0_41, %c143] : memref<4x401xf32, #tpu.memory_space<vmem>>, vector<4x256xf32>
    %c-1_i32_42 = arith.constant -1 : i32
    %87 = vector.broadcast %c-1_i32_42 : i32 to vector<1x256xi32>
    %88 = arith.addi %16, %87 : vector<1x256xi32>
    %c0_i32_43 = arith.constant 0 : i32
    %89 = vector.broadcast %c0_i32_43 : i32 to vector<1x256xi32>
    %90 = arith.cmpi sge, %88, %89 : vector<1x256xi32>
    %c-1_i32_44 = arith.constant -1 : i32
    %91 = vector.broadcast %c-1_i32_44 : i32 to vector<1x256xi32>
    %92 = arith.addi %16, %91 : vector<1x256xi32>
    %c16_i32_45 = arith.constant 16 : i32
    %93 = vector.broadcast %c16_i32_45 : i32 to vector<1x256xi32>
    %94 = arith.cmpi slt, %92, %93 : vector<1x256xi32>
    %95 = arith.andi %90, %94 : vector<1x256xi1>
    %cst_46 = arith.constant 0.000000e+00 : f32
    %96 = vector.shape_cast %95 : vector<1x256xi1> to vector<1x256xi1>
    %97 = vector.broadcast %96 : vector<1x256xi1> to vector<4x256xi1>
    %98 = vector.broadcast %cst_46 : f32 to vector<4x256xf32>
    %99 = arith.select %97, %86, %98 : vector<4x256xi1>, vector<4x256xf32>
    %c24 = arith.constant 24 : index
    %c0_47 = arith.constant 0 : index
    %100 = vector.load %arg12[%c24, %c0_47] : memref<36x256xf32, #tpu.memory_space<vmem>>, vector<4x256xf32>
    tpu.vector_store %arg12[%c24, %c0_47], %99 {strides = array<i32>} : memref<36x256xf32, #tpu.memory_space<vmem>>, vector<4x256xf32>,
    %c0_48 = arith.constant 0 : index
    %c144 = arith.constant 144 : index
    %101 = vector.load %arg11[%c0_48, %c144] : memref<4x401xf32, #tpu.memory_space<vmem>>, vector<4x256xf32>
    %c28 = arith.constant 28 : index
    %c0_49 = arith.constant 0 : index
    %102 = vector.load %arg12[%c28, %c0_49] : memref<36x256xf32, #tpu.memory_space<vmem>>, vector<4x256xf32>
    tpu.vector_store %arg12[%c28, %c0_49], %101 {strides = array<i32>} : memref<36x256xf32, #tpu.memory_space<vmem>>, vector<4x256xf32>,
    %c0_50 = arith.constant 0 : index
    %c145 = arith.constant 145 : index
    %103 = vector.load %arg11[%c0_50, %c145] : memref<4x401xf32, #tpu.memory_space<vmem>>, vector<4x256xf32>
    %c1_i32_51 = arith.constant 1 : i32
    %104 = vector.broadcast %c1_i32_51 : i32 to vector<1x256xi32>
    %105 = arith.addi %16, %104 : vector<1x256xi32>
    %c0_i32_52 = arith.constant 0 : i32
    %106 = vector.broadcast %c0_i32_52 : i32 to vector<1x256xi32>
    %107 = arith.cmpi sge, %105, %106 : vector<1x256xi32>
    %c1_i32_53 = arith.constant 1 : i32
    %108 = vector.broadcast %c1_i32_53 : i32 to vector<1x256xi32>
    %109 = arith.addi %16, %108 : vector<1x256xi32>
    %c16_i32_54 = arith.constant 16 : i32
    %110 = vector.broadcast %c16_i32_54 : i32 to vector<1x256xi32>
    %111 = arith.cmpi slt, %109, %110 : vector<1x256xi32>
    %112 = arith.andi %107, %111 : vector<1x256xi1>
    %cst_55 = arith.constant 0.000000e+00 : f32
    %113 = vector.shape_cast %112 : vector<1x256xi1> to vector<1x256xi1>
    %114 = vector.broadcast %113 : vector<1x256xi1> to vector<4x256xi1>
    %115 = vector.broadcast %cst_55 : f32 to vector<4x256xf32>
    %116 = arith.select %114, %103, %115 : vector<4x256xi1>, vector<4x256xf32>
    %c32 = arith.constant 32 : index
    %c0_56 = arith.constant 0 : index
    %117 = vector.load %arg12[%c32, %c0_56] : memref<36x256xf32, #tpu.memory_space<vmem>>, vector<4x256xf32>
    tpu.vector_store %arg12[%c32, %c0_56], %116 {strides = array<i32>} : memref<36x256xf32, #tpu.memory_space<vmem>>, vector<4x256xf32>,
    %c0_57 = arith.constant 0 : index
    %c0_58 = arith.constant 0 : index
    %118 = vector.load %arg12[%c0_57, %c0_58] : memref<36x256xf32, #tpu.memory_space<vmem>>, vector<36x256xf32>
    %c0_59 = arith.constant 0 : index
    %c0_60 = arith.constant 0 : index
    %119 = vector.load %arg2[%c0_59, %c0_60] : memref<8x36xf32, #tpu.memory_space<vmem>>, vector<8x36xf32>
    %cst_61 = arith.constant dense<0.000000e+00> : vector<8x256xf32>
    %120 = tpu.matmul %119, %118, %cst_61 {dimension_numbers = #tpu.dot_dimension_numbers<[1], [0], [0], [1], [0, 0, 1, 1], [], []>} : vector<8x36xf32>, vector<36x256xf32>, vector<8x256xf32> -> vector<8x256xf32>
    %c0_62 = arith.constant 0 : index
    %c0_63 = arith.constant 0 : index
    %121 = vector.load %arg3[%c0_62, %c0_63] : memref<8x1xf32, #tpu.memory_space<vmem>>, vector<8x1xf32>
    %122 = vector.broadcast %121 : vector<8x1xf32> to vector<8x256xf32>
    %123 = arith.addf %120, %122 : vector<8x256xf32>
    %cst_64 = arith.constant 0.000000e+00 : f32
    %124 = vector.broadcast %cst_64 : f32 to vector<8x256xf32>
    %125 = arith.maximumf %123, %124 : vector<8x256xf32>
    %c0_65 = arith.constant 0 : index
    %c0_66 = arith.constant 0 : index
    %126 = vector.load %arg4[%c0_65, %c0_66] : memref<8x36xf32, #tpu.memory_space<vmem>>, vector<8x36xf32>
    %cst_67 = arith.constant dense<0.000000e+00> : vector<8x256xf32>
    %127 = tpu.matmul %126, %118, %cst_67 {dimension_numbers = #tpu.dot_dimension_numbers<[1], [0], [0], [1], [0, 0, 1, 1], [], []>} : vector<8x36xf32>, vector<36x256xf32>, vector<8x256xf32> -> vector<8x256xf32>
    %c0_68 = arith.constant 0 : index
    %c0_69 = arith.constant 0 : index
    %128 = vector.load %arg5[%c0_68, %c0_69] : memref<8x1xf32, #tpu.memory_space<vmem>>, vector<8x1xf32>
    %129 = vector.broadcast %128 : vector<8x1xf32> to vector<8x256xf32>
    %130 = arith.addf %127, %129 : vector<8x256xf32>
    %cst_70 = arith.constant 0.000000e+00 : f32
    %131 = vector.broadcast %cst_70 : f32 to vector<8x256xf32>
    %132 = arith.maximumf %130, %131 : vector<8x256xf32>
    %cst_71 = arith.constant 0.000000e+00 : f32
    %133 = vector.broadcast %cst_71 : f32 to vector<8x401xf32>
    %c0_72 = arith.constant 0 : index
    %c0_73 = arith.constant 0 : index
    %134 = vector.load %arg13[%c0_72, %c0_73] : memref<8x401xf32, #tpu.memory_space<vmem>>, vector<8x401xf32>
    tpu.vector_store %arg13[%c0_72, %c0_73], %133 {strides = array<i32>} : memref<8x401xf32, #tpu.memory_space<vmem>>, vector<8x401xf32>,
    %c0_74 = arith.constant 0 : index
    %c128_75 = arith.constant 128 : index
    %135 = vector.load %arg13[%c0_74, %c128_75] : memref<8x401xf32, #tpu.memory_space<vmem>>, vector<8x256xf32>
    tpu.vector_store %arg13[%c0_74, %c128_75], %132 {strides = array<i32>} : memref<8x401xf32, #tpu.memory_space<vmem>>, vector<8x256xf32>,
    %c0_76 = arith.constant 0 : index
    %c111_77 = arith.constant 111 : index
    %136 = vector.load %arg13[%c0_76, %c111_77] : memref<8x401xf32, #tpu.memory_space<vmem>>, vector<8x256xf32>
    %c-1_i32_78 = arith.constant -1 : i32
    %137 = vector.broadcast %c-1_i32_78 : i32 to vector<1x256xi32>
    %138 = arith.addi %16, %137 : vector<1x256xi32>
    %c0_i32_79 = arith.constant 0 : i32
    %139 = vector.broadcast %c0_i32_79 : i32 to vector<1x256xi32>
    %140 = arith.cmpi sge, %138, %139 : vector<1x256xi32>
    %c-1_i32_80 = arith.constant -1 : i32
    %141 = vector.broadcast %c-1_i32_80 : i32 to vector<1x256xi32>
    %142 = arith.addi %16, %141 : vector<1x256xi32>
    %c16_i32_81 = arith.constant 16 : i32
    %143 = vector.broadcast %c16_i32_81 : i32 to vector<1x256xi32>
    %144 = arith.cmpi slt, %142, %143 : vector<1x256xi32>
    %145 = arith.andi %140, %144 : vector<1x256xi1>
    %cst_82 = arith.constant 0.000000e+00 : f32
    %146 = vector.shape_cast %145 : vector<1x256xi1> to vector<1x256xi1>
    %147 = vector.broadcast %146 : vector<1x256xi1> to vector<8x256xi1>
    %148 = vector.broadcast %cst_82 : f32 to vector<8x256xf32>
    %149 = arith.select %147, %136, %148 : vector<8x256xi1>, vector<8x256xf32>
    %c0_83 = arith.constant 0 : index
    %c0_84 = arith.constant 0 : index
    %150 = vector.load %arg14[%c0_83, %c0_84] : memref<72x256xf32, #tpu.memory_space<vmem>>, vector<8x256xf32>
    tpu.vector_store %arg14[%c0_83, %c0_84], %149 {strides = array<i32>} : memref<72x256xf32, #tpu.memory_space<vmem>>, vector<8x256xf32>,
    %c0_85 = arith.constant 0 : index
    %c112_86 = arith.constant 112 : index
    %151 = vector.load %arg13[%c0_85, %c112_86] : memref<8x401xf32, #tpu.memory_space<vmem>>, vector<8x256xf32>
    %c8_87 = arith.constant 8 : index
    %c0_88 = arith.constant 0 : index
    %152 = vector.load %arg14[%c8_87, %c0_88] : memref<72x256xf32, #tpu.memory_space<vmem>>, vector<8x256xf32>
    tpu.vector_store %arg14[%c8_87, %c0_88], %151 {strides = array<i32>} : memref<72x256xf32, #tpu.memory_space<vmem>>, vector<8x256xf32>,
    %c0_89 = arith.constant 0 : index
    %c113_90 = arith.constant 113 : index
    %153 = vector.load %arg13[%c0_89, %c113_90] : memref<8x401xf32, #tpu.memory_space<vmem>>, vector<8x256xf32>
    %c1_i32_91 = arith.constant 1 : i32
    %154 = vector.broadcast %c1_i32_91 : i32 to vector<1x256xi32>
    %155 = arith.addi %16, %154 : vector<1x256xi32>
    %c0_i32_92 = arith.constant 0 : i32
    %156 = vector.broadcast %c0_i32_92 : i32 to vector<1x256xi32>
    %157 = arith.cmpi sge, %155, %156 : vector<1x256xi32>
    %c1_i32_93 = arith.constant 1 : i32
    %158 = vector.broadcast %c1_i32_93 : i32 to vector<1x256xi32>
    %159 = arith.addi %16, %158 : vector<1x256xi32>
    %c16_i32_94 = arith.constant 16 : i32
    %160 = vector.broadcast %c16_i32_94 : i32 to vector<1x256xi32>
    %161 = arith.cmpi slt, %159, %160 : vector<1x256xi32>
    %162 = arith.andi %157, %161 : vector<1x256xi1>
    %cst_95 = arith.constant 0.000000e+00 : f32
    %163 = vector.shape_cast %162 : vector<1x256xi1> to vector<1x256xi1>
    %164 = vector.broadcast %163 : vector<1x256xi1> to vector<8x256xi1>
    %165 = vector.broadcast %cst_95 : f32 to vector<8x256xf32>
    %166 = arith.select %164, %153, %165 : vector<8x256xi1>, vector<8x256xf32>
    %c16_96 = arith.constant 16 : index
    %c0_97 = arith.constant 0 : index
    %167 = vector.load %arg14[%c16_96, %c0_97] : memref<72x256xf32, #tpu.memory_space<vmem>>, vector<8x256xf32>
    tpu.vector_store %arg14[%c16_96, %c0_97], %166 {strides = array<i32>} : memref<72x256xf32, #tpu.memory_space<vmem>>, vector<8x256xf32>,
    %c0_98 = arith.constant 0 : index
    %c127_99 = arith.constant 127 : index
    %168 = vector.load %arg13[%c0_98, %c127_99] : memref<8x401xf32, #tpu.memory_space<vmem>>, vector<8x256xf32>
    %c-1_i32_100 = arith.constant -1 : i32
    %169 = vector.broadcast %c-1_i32_100 : i32 to vector<1x256xi32>
    %170 = arith.addi %16, %169 : vector<1x256xi32>
    %c0_i32_101 = arith.constant 0 : i32
    %171 = vector.broadcast %c0_i32_101 : i32 to vector<1x256xi32>
    %172 = arith.cmpi sge, %170, %171 : vector<1x256xi32>
    %c-1_i32_102 = arith.constant -1 : i32
    %173 = vector.broadcast %c-1_i32_102 : i32 to vector<1x256xi32>
    %174 = arith.addi %16, %173 : vector<1x256xi32>
    %c16_i32_103 = arith.constant 16 : i32
    %175 = vector.broadcast %c16_i32_103 : i32 to vector<1x256xi32>
    %176 = arith.cmpi slt, %174, %175 : vector<1x256xi32>
    %177 = arith.andi %172, %176 : vector<1x256xi1>
    %cst_104 = arith.constant 0.000000e+00 : f32
    %178 = vector.shape_cast %177 : vector<1x256xi1> to vector<1x256xi1>
    %179 = vector.broadcast %178 : vector<1x256xi1> to vector<8x256xi1>
    %180 = vector.broadcast %cst_104 : f32 to vector<8x256xf32>
    %181 = arith.select %179, %168, %180 : vector<8x256xi1>, vector<8x256xf32>
    %c24_105 = arith.constant 24 : index
    %c0_106 = arith.constant 0 : index
    %182 = vector.load %arg14[%c24_105, %c0_106] : memref<72x256xf32, #tpu.memory_space<vmem>>, vector<8x256xf32>
    tpu.vector_store %arg14[%c24_105, %c0_106], %181 {strides = array<i32>} : memref<72x256xf32, #tpu.memory_space<vmem>>, vector<8x256xf32>,
    %c0_107 = arith.constant 0 : index
    %c128_108 = arith.constant 128 : index
    %183 = vector.load %arg13[%c0_107, %c128_108] : memref<8x401xf32, #tpu.memory_space<vmem>>, vector<8x256xf32>
    %c32_109 = arith.constant 32 : index
    %c0_110 = arith.constant 0 : index
    %184 = vector.load %arg14[%c32_109, %c0_110] : memref<72x256xf32, #tpu.memory_space<vmem>>, vector<8x256xf32>
    tpu.vector_store %arg14[%c32_109, %c0_110], %183 {strides = array<i32>} : memref<72x256xf32, #tpu.memory_space<vmem>>, vector<8x256xf32>,
    %c0_111 = arith.constant 0 : index
    %c129_112 = arith.constant 129 : index
    %185 = vector.load %arg13[%c0_111, %c129_112] : memref<8x401xf32, #tpu.memory_space<vmem>>, vector<8x256xf32>
    %c1_i32_113 = arith.constant 1 : i32
    %186 = vector.broadcast %c1_i32_113 : i32 to vector<1x256xi32>
    %187 = arith.addi %16, %186 : vector<1x256xi32>
    %c0_i32_114 = arith.constant 0 : i32
    %188 = vector.broadcast %c0_i32_114 : i32 to vector<1x256xi32>
    %189 = arith.cmpi sge, %187, %188 : vector<1x256xi32>
    %c1_i32_115 = arith.constant 1 : i32
    %190 = vector.broadcast %c1_i32_115 : i32 to vector<1x256xi32>
    %191 = arith.addi %16, %190 : vector<1x256xi32>
    %c16_i32_116 = arith.constant 16 : i32
    %192 = vector.broadcast %c16_i32_116 : i32 to vector<1x256xi32>
    %193 = arith.cmpi slt, %191, %192 : vector<1x256xi32>
    %194 = arith.andi %189, %193 : vector<1x256xi1>
    %cst_117 = arith.constant 0.000000e+00 : f32
    %195 = vector.shape_cast %194 : vector<1x256xi1> to vector<1x256xi1>
    %196 = vector.broadcast %195 : vector<1x256xi1> to vector<8x256xi1>
    %197 = vector.broadcast %cst_117 : f32 to vector<8x256xf32>
    %198 = arith.select %196, %185, %197 : vector<8x256xi1>, vector<8x256xf32>
    %c40 = arith.constant 40 : index
    %c0_118 = arith.constant 0 : index
    %199 = vector.load %arg14[%c40, %c0_118] : memref<72x256xf32, #tpu.memory_space<vmem>>, vector<8x256xf32>
    tpu.vector_store %arg14[%c40, %c0_118], %198 {strides = array<i32>} : memref<72x256xf32, #tpu.memory_space<vmem>>, vector<8x256xf32>,
    %c0_119 = arith.constant 0 : index
    %c143_120 = arith.constant 143 : index
    %200 = vector.load %arg13[%c0_119, %c143_120] : memref<8x401xf32, #tpu.memory_space<vmem>>, vector<8x256xf32>
    %c-1_i32_121 = arith.constant -1 : i32
    %201 = vector.broadcast %c-1_i32_121 : i32 to vector<1x256xi32>
    %202 = arith.addi %16, %201 : vector<1x256xi32>
    %c0_i32_122 = arith.constant 0 : i32
    %203 = vector.broadcast %c0_i32_122 : i32 to vector<1x256xi32>
    %204 = arith.cmpi sge, %202, %203 : vector<1x256xi32>
    %c-1_i32_123 = arith.constant -1 : i32
    %205 = vector.broadcast %c-1_i32_123 : i32 to vector<1x256xi32>
    %206 = arith.addi %16, %205 : vector<1x256xi32>
    %c16_i32_124 = arith.constant 16 : i32
    %207 = vector.broadcast %c16_i32_124 : i32 to vector<1x256xi32>
    %208 = arith.cmpi slt, %206, %207 : vector<1x256xi32>
    %209 = arith.andi %204, %208 : vector<1x256xi1>
    %cst_125 = arith.constant 0.000000e+00 : f32
    %210 = vector.shape_cast %209 : vector<1x256xi1> to vector<1x256xi1>
    %211 = vector.broadcast %210 : vector<1x256xi1> to vector<8x256xi1>
    %212 = vector.broadcast %cst_125 : f32 to vector<8x256xf32>
    %213 = arith.select %211, %200, %212 : vector<8x256xi1>, vector<8x256xf32>
    %c48 = arith.constant 48 : index
    %c0_126 = arith.constant 0 : index
    %214 = vector.load %arg14[%c48, %c0_126] : memref<72x256xf32, #tpu.memory_space<vmem>>, vector<8x256xf32>
    tpu.vector_store %arg14[%c48, %c0_126], %213 {strides = array<i32>} : memref<72x256xf32, #tpu.memory_space<vmem>>, vector<8x256xf32>,
    %c0_127 = arith.constant 0 : index
    %c144_128 = arith.constant 144 : index
    %215 = vector.load %arg13[%c0_127, %c144_128] : memref<8x401xf32, #tpu.memory_space<vmem>>, vector<8x256xf32>
    %c56 = arith.constant 56 : index
    %c0_129 = arith.constant 0 : index
    %216 = vector.load %arg14[%c56, %c0_129] : memref<72x256xf32, #tpu.memory_space<vmem>>, vector<8x256xf32>
    tpu.vector_store %arg14[%c56, %c0_129], %215 {strides = array<i32>} : memref<72x256xf32, #tpu.memory_space<vmem>>, vector<8x256xf32>,
    %c0_130 = arith.constant 0 : index
    %c145_131 = arith.constant 145 : index
    %217 = vector.load %arg13[%c0_130, %c145_131] : memref<8x401xf32, #tpu.memory_space<vmem>>, vector<8x256xf32>
    %c1_i32_132 = arith.constant 1 : i32
    %218 = vector.broadcast %c1_i32_132 : i32 to vector<1x256xi32>
    %219 = arith.addi %16, %218 : vector<1x256xi32>
    %c0_i32_133 = arith.constant 0 : i32
    %220 = vector.broadcast %c0_i32_133 : i32 to vector<1x256xi32>
    %221 = arith.cmpi sge, %219, %220 : vector<1x256xi32>
    %c1_i32_134 = arith.constant 1 : i32
    %222 = vector.broadcast %c1_i32_134 : i32 to vector<1x256xi32>
    %223 = arith.addi %16, %222 : vector<1x256xi32>
    %c16_i32_135 = arith.constant 16 : i32
    %224 = vector.broadcast %c16_i32_135 : i32 to vector<1x256xi32>
    %225 = arith.cmpi slt, %223, %224 : vector<1x256xi32>
    %226 = arith.andi %221, %225 : vector<1x256xi1>
    %cst_136 = arith.constant 0.000000e+00 : f32
    %227 = vector.shape_cast %226 : vector<1x256xi1> to vector<1x256xi1>
    %228 = vector.broadcast %227 : vector<1x256xi1> to vector<8x256xi1>
    %229 = vector.broadcast %cst_136 : f32 to vector<8x256xf32>
    %230 = arith.select %228, %217, %229 : vector<8x256xi1>, vector<8x256xf32>
    %c64 = arith.constant 64 : index
    %c0_137 = arith.constant 0 : index
    %231 = vector.load %arg14[%c64, %c0_137] : memref<72x256xf32, #tpu.memory_space<vmem>>, vector<8x256xf32>
    tpu.vector_store %arg14[%c64, %c0_137], %230 {strides = array<i32>} : memref<72x256xf32, #tpu.memory_space<vmem>>, vector<8x256xf32>,
    %c0_138 = arith.constant 0 : index
    %c0_139 = arith.constant 0 : index
    %232 = vector.load %arg14[%c0_138, %c0_139] : memref<72x256xf32, #tpu.memory_space<vmem>>, vector<72x256xf32>
    %c0_140 = arith.constant 0 : index
    %c0_141 = arith.constant 0 : index
    %233 = vector.load %arg6[%c0_140, %c0_141] : memref<8x72xf32, #tpu.memory_space<vmem>>, vector<8x72xf32>
    %cst_142 = arith.constant dense<0.000000e+00> : vector<8x256xf32>
    %234 = tpu.matmul %233, %232, %cst_142 {dimension_numbers = #tpu.dot_dimension_numbers<[1], [0], [0], [1], [0, 0, 1, 1], [], []>} : vector<8x72xf32>, vector<72x256xf32>, vector<8x256xf32> -> vector<8x256xf32>
    %c0_143 = arith.constant 0 : index
    %c0_144 = arith.constant 0 : index
    %235 = vector.load %arg7[%c0_143, %c0_144] : memref<8x1xf32, #tpu.memory_space<vmem>>, vector<8x1xf32>
    %236 = vector.broadcast %235 : vector<8x1xf32> to vector<8x256xf32>
    %237 = arith.addf %234, %236 : vector<8x256xf32>
    %c0_145 = arith.constant 0 : index
    %c0_146 = arith.constant 0 : index
    %238 = vector.load %arg8[%c0_145, %c0_146] : memref<8x4xf32, #tpu.memory_space<vmem>>, vector<8x4xf32>
    %cst_147 = arith.constant dense<0.000000e+00> : vector<8x256xf32>
    %239 = tpu.matmul %238, %18, %cst_147 {dimension_numbers = #tpu.dot_dimension_numbers<[1], [0], [0], [1], [0, 0, 1, 1], [], []>} : vector<8x4xf32>, vector<4x256xf32>, vector<8x256xf32> -> vector<8x256xf32>
    %c0_148 = arith.constant 0 : index
    %c0_149 = arith.constant 0 : index
    %240 = vector.load %arg9[%c0_148, %c0_149] : memref<8x1xf32, #tpu.memory_space<vmem>>, vector<8x1xf32>
    %241 = vector.broadcast %240 : vector<8x1xf32> to vector<8x256xf32>
    %242 = arith.addf %239, %241 : vector<8x256xf32>
    %243 = arith.addf %237, %242 : vector<8x256xf32>
    %244 = arith.negf %243 : vector<8x256xf32>
    %245 = math.exp %244 : vector<8x256xf32>
    %cst_150 = arith.constant 1.000000e+00 : f32
    %246 = vector.broadcast %cst_150 : f32 to vector<8x256xf32>
    %247 = arith.addf %246, %245 : vector<8x256xf32>
    %248 = arith.divf %246, %247 : vector<8x256xf32>
    %cst_151 = arith.constant 1.000000e+00 : f32
    %249 = vector.broadcast %cst_151 : f32 to vector<8x256xf32>
    %250 = arith.addf %249, %248 : vector<8x256xf32>
    %251 = arith.mulf %250, %125 : vector<8x256xf32>
    %c0_152 = arith.constant 0 : index
    %c0_153 = arith.constant 0 : index
    %c0_154 = arith.constant 0 : index
    %252 = vector.load %arg10[%c0_152, %c0_153, %c0_154] : memref<1x8x256xf32, #tpu.memory_space<vmem>>, vector<1x8x256xf32>
    %253 = vector.shape_cast %252 : vector<1x8x256xf32> to vector<8x256xf32>
    %254 = vector.shape_cast %251 : vector<8x256xf32> to vector<1x8x256xf32>
    tpu.vector_store %arg10[%c0_152, %c0_153, %c0_154], %254 {strides = array<i32>} : memref<1x8x256xf32, #tpu.memory_space<vmem>>, vector<1x8x256xf32>,
    return
  }
  func.func @transform_0(%arg0: i32) -> (i32, i32, i32) {
    %c0_i32 = arith.constant 0 : i32
    %c0_i32_0 = arith.constant 0 : i32
    %c0_i32_1 = arith.constant 0 : i32
    return %arg0, %c0_i32, %c0_i32_0 : i32, i32, i32
  }
  func.func @transform_1(%arg0: i32) -> (i32, i32) {
    %c0_i32 = arith.constant 0 : i32
    %c0_i32_0 = arith.constant 0 : i32
    %c0_i32_1 = arith.constant 0 : i32
    return %c0_i32, %c0_i32_0 : i32, i32
  }
  func.func @transform_2(%arg0: i32) -> (i32, i32) {
    %c0_i32 = arith.constant 0 : i32
    %c0_i32_0 = arith.constant 0 : i32
    %c0_i32_1 = arith.constant 0 : i32
    return %c0_i32, %c0_i32_0 : i32, i32
  }
  func.func @transform_3(%arg0: i32) -> (i32, i32) {
    %c0_i32 = arith.constant 0 : i32
    %c0_i32_0 = arith.constant 0 : i32
    %c0_i32_1 = arith.constant 0 : i32
    return %c0_i32, %c0_i32_0 : i32, i32
  }
  func.func @transform_4(%arg0: i32) -> (i32, i32) {
    %c0_i32 = arith.constant 0 : i32
    %c0_i32_0 = arith.constant 0 : i32
    %c0_i32_1 = arith.constant 0 : i32
    return %c0_i32, %c0_i32_0 : i32, i32
  }
  func.func @transform_5(%arg0: i32) -> (i32, i32) {
    %c0_i32 = arith.constant 0 : i32
    %c0_i32_0 = arith.constant 0 : i32
    %c0_i32_1 = arith.constant 0 : i32
    return %c0_i32, %c0_i32_0 : i32, i32
  }
  func.func @transform_6(%arg0: i32) -> (i32, i32) {
    %c0_i32 = arith.constant 0 : i32
    %c0_i32_0 = arith.constant 0 : i32
    %c0_i32_1 = arith.constant 0 : i32
    return %c0_i32, %c0_i32_0 : i32, i32
  }
  func.func @transform_7(%arg0: i32) -> (i32, i32) {
    %c0_i32 = arith.constant 0 : i32
    %c0_i32_0 = arith.constant 0 : i32
    %c0_i32_1 = arith.constant 0 : i32
    return %c0_i32, %c0_i32_0 : i32, i32
  }
  func.func @transform_8(%arg0: i32) -> (i32, i32) {
    %c0_i32 = arith.constant 0 : i32
    %c0_i32_0 = arith.constant 0 : i32
    %c0_i32_1 = arith.constant 0 : i32
    return %c0_i32, %c0_i32_0 : i32, i32
  }
  func.func @transform_9(%arg0: i32) -> (i32, i32, i32) {
    %c0_i32 = arith.constant 0 : i32
    %c0_i32_0 = arith.constant 0 : i32
    %c0_i32_1 = arith.constant 0 : i32
    return %arg0, %c0_i32, %c0_i32_0 : i32, i32, i32
  }
}

</mosaic_0001>

<llo_original>
// kernel: attention_stage5_forward.1
$region0: #{attention_stage5_forward.1}
  #allocation0 [shape = 'u32[]', space=smem, size = 0x4, offset = 0x4, fixed_abs, tag = 'smem constant byte address 0x4 - core index']
  #allocation1 [shape = 'u32[144,128]{1,0:T(1,128)}', space=vmem, size = 0x12000, scoped, tag = 'internal scratch']
  #allocation2 [shape = 'f32[4,401]{1,0:T(4,128)}', space=vmem, size = 0x2000, scoped, tag = 'scratch operand']
  #allocation3 [shape = 'f32[36,256]{1,0:T(8,128)}', space=vmem, size = 0xa000, scoped, tag = 'scratch operand']
  #allocation4 [shape = 'f32[8,401]{1,0:T(8,128)}', space=vmem, size = 0x4000, scoped, tag = 'scratch operand']
  #allocation5 [shape = 'f32[72,256]{1,0:T(8,128)}', space=vmem, size = 0x12000, scoped, tag = 'scratch operand']
  %s0 = inlined_call_operand.vmem [shape: f32[2,4,256], index: 0, kind: input, shape index: {}]
  %s1 = inlined_call_operand.vmem [shape: f32[8,36], index: 1, kind: input, shape index: {}]
  %s2 = inlined_call_operand.vmem [shape: f32[8,1], index: 2, kind: input, shape index: {}]
  %s3 = inlined_call_operand.vmem [shape: f32[8,36], index: 3, kind: input, shape index: {}]
  %s4 = inlined_call_operand.vmem [shape: f32[8,1], index: 4, kind: input, shape index: {}]
  %s5 = inlined_call_operand.vmem [shape: f32[8,72], index: 5, kind: input, shape index: {}]
  %s6 = inlined_call_operand.vmem [shape: f32[8,1], index: 6, kind: input, shape index: {}]
  %s7 = inlined_call_operand.vmem [shape: f32[8,4], index: 7, kind: input, shape index: {}]
  %s8 = inlined_call_operand.vmem [shape: f32[8,1], index: 8, kind: input, shape index: {}]
  %s9 = inlined_call_operand.vmem [shape: f32[2,8,256], index: 9, kind: output, shape index: {}]
  %s10 = sld [smem:[#allocation0]]
  $region69: #{attention_stage5_forward.1} parent=0
    _
  %s12 = ssub.s32 1, %s10
  %s13 = scalar_select 0, %s12, %s10
  loop: start=0, step=1, limit=4
  $region2: #{attention_stage5_forward.1} parent=0 // loop_pre_header
    _
  $region3: #{attention_stage5_forward.1} parent=0 // loop_header
    %s15 = sphi 0, %s19
    %p16 = scmp.ge.s32.totalorder %s15, 4
    %s25 = sphi 0, %s27
    %s28 = sphi 0, %s25
    %s29 = sphi 0, %s28
    %s45 = sphi 0, %s29
    %s49 = sphi 0, %s49
    %s51 = sphi 0, %s49
    %s52 = sphi 0, %s51
    %s66 = sphi 0, %s52
    %s70 = sphi 0, %s70
    %s72 = sphi 0, %s70
    %s73 = sphi 0, %s72
    %s87 = sphi 0, %s73
    %s91 = sphi 0, %s91
    %s93 = sphi 0, %s91
    %s94 = sphi 0, %s93
    %s108 = sphi 0, %s94
    %s112 = sphi 0, %s112
    %s114 = sphi 0, %s112
    %s115 = sphi 0, %s114
    %s129 = sphi 0, %s115
    %s133 = sphi 0, %s133
    %s135 = sphi 0, %s133
    %s136 = sphi 0, %s135
    %s150 = sphi 0, %s136
    %s154 = sphi 0, %s154
    %s156 = sphi 0, %s154
    %s157 = sphi 0, %s156
    %s171 = sphi 0, %s157
    %s175 = sphi 0, %s175
    %s177 = sphi 0, %s175
    %s178 = sphi 0, %s177
    %s192 = sphi 0, %s178
    %s196 = sphi 0, %s196
    %s198 = sphi 0, %s196
    %s199 = sphi 0, %s198
    %s213 = sphi 0, %s199
    %s219 = sphi 0, %s221
    %s222 = sphi 0, %s219
    %s223 = sphi 0, %s222
    %s239 = sphi 0, %s223
  $region4: #{attention_stage5_forward.1} parent=0 // loop_header_branch
    %18 = sbr.rel (%p16) target = $region8
  $region5: #{attention_stage5_forward.1} parent=0 // loop_body
    %s20 = ssub.s32 %s15, 1
    %s21 = ssub.s32 %s15, 2
    %s22 = sadd.s32 %s15, 1
    %s23 = ssub.s32 %s15, %s22
    %p24 = scmp.eq.s32.totalorder %s23, 0
    %s26 = sadd.s32 %s25, 1
    %s27 = scalar_select %p24, %s25, %s26
    %p30 = pneg %p24
    %p31 = scmp.eq.s32.totalorder %s15, 1
    %p32 = por %p30, %p31
    %p33 = scmp.ne.s32.totalorder %s25, %s28
    %p34 = scmp.eq.s32.totalorder %s15, 0
    %p35 = por %p33, %p34
    %p36 = scmp.ne.s32.totalorder %s25, %s28
    %p37 = scmp.eq.s32.totalorder %s20, 1
    %p38 = por %p36, %p37
    %p39 = scmp.ne.s32.totalorder %s28, %s29
    %p40 = scmp.eq.s32.totalorder %s20, 0
    %p41 = por %p39, %p40
    %p42 = scmp.ne.s32.totalorder %s28, %s29
    %p43 = scmp.eq.s32.totalorder %s21, 1
    %p44 = por %p42, %p43
    %p46 = scmp.ne.s32.totalorder %s29, %s45
    %p47 = scmp.eq.s32.totalorder %s21, 0
    %p48 = por %p46, %p47
    %s50 = sadd.s32 %s49, 1
    %p53 = scmp.eq.s32.totalorder %s15, 1
    %p54 = scmp.ne.s32.totalorder %s49, %s51
    %p55 = scmp.eq.s32.totalorder %s15, 0
    %p56 = por %p54, %p55
    %p57 = scmp.ne.s32.totalorder %s49, %s51
    %p58 = scmp.eq.s32.totalorder %s20, 1
    %p59 = por %p57, %p58
    %p60 = scmp.ne.s32.totalorder %s51, %s52
    %p61 = scmp.eq.s32.totalorder %s20, 0
    %p62 = por %p60, %p61
    %p63 = scmp.ne.s32.totalorder %s51, %s52
    %p64 = scmp.eq.s32.totalorder %s21, 1
    %p65 = por %p63, %p64
    %p67 = scmp.ne.s32.totalorder %s52, %s66
    %p68 = scmp.eq.s32.totalorder %s21, 0
    %p69 = por %p67, %p68
    %s71 = sadd.s32 %s70, 1
    %p74 = scmp.eq.s32.totalorder %s15, 1
    %p75 = scmp.ne.s32.totalorder %s70, %s72
    %p76 = scmp.eq.s32.totalorder %s15, 0
    %p77 = por %p75, %p76
    %p78 = scmp.ne.s32.totalorder %s70, %s72
    %p79 = scmp.eq.s32.totalorder %s20, 1
    %p80 = por %p78, %p79
    %p81 = scmp.ne.s32.totalorder %s72, %s73
    %p82 = scmp.eq.s32.totalorder %s20, 0
    %p83 = por %p81, %p82
    %p84 = scmp.ne.s32.totalorder %s72, %s73
    %p85 = scmp.eq.s32.totalorder %s21, 1
    %p86 = por %p84, %p85
    %p88 = scmp.ne.s32.totalorder %s73, %s87
    %p89 = scmp.eq.s32.totalorder %s21, 0
    %p90 = por %p88, %p89
    %s92 = sadd.s32 %s91, 1
    %p95 = scmp.eq.s32.totalorder %s15, 1
    %p96 = scmp.ne.s32.totalorder %s91, %s93
    %p97 = scmp.eq.s32.totalorder %s15, 0
    %p98 = por %p96, %p97
    %p99 = scmp.ne.s32.totalorder %s91, %s93
    %p100 = scmp.eq.s32.totalorder %s20, 1
    %p101 = por %p99, %p100
    %p102 = scmp.ne.s32.totalorder %s93, %s94
    %p103 = scmp.eq.s32.totalorder %s20, 0
    %p104 = por %p102, %p103
    %p105 = scmp.ne.s32.totalorder %s93, %s94
    %p106 = scmp.eq.s32.totalorder %s21, 1
    %p107 = por %p105, %p106
    %p109 = scmp.ne.s32.totalorder %s94, %s108
    %p110 = scmp.eq.s32.totalorder %s21, 0
    %p111 = por %p109, %p110
    %s113 = sadd.s32 %s112, 1
    %p116 = scmp.eq.s32.totalorder %s15, 1
    %p117 = scmp.ne.s32.totalorder %s112, %s114
    %p118 = scmp.eq.s32.totalorder %s15, 0
    %p119 = por %p117, %p118
    %p120 = scmp.ne.s32.totalorder %s112, %s114
    %p121 = scmp.eq.s32.totalorder %s20, 1
    %p122 = por %p120, %p121
    %p123 = scmp.ne.s32.totalorder %s114, %s115
    %p124 = scmp.eq.s32.totalorder %s20, 0
    %p125 = por %p123, %p124
    %p126 = scmp.ne.s32.totalorder %s114, %s115
    %p127 = scmp.eq.s32.totalorder %s21, 1
    %p128 = por %p126, %p127
    %p130 = scmp.ne.s32.totalorder %s115, %s129
    %p131 = scmp.eq.s32.totalorder %s21, 0
    %p132 = por %p130, %p131
    %s134 = sadd.s32 %s133, 1
    %p137 = scmp.eq.s32.totalorder %s15, 1
    %p138 = scmp.ne.s32.totalorder %s133, %s135
    %p139 = scmp.eq.s32.totalorder %s15, 0
    %p140 = por %p138, %p139
    %p141 = scmp.ne.s32.totalorder %s133, %s135
    %p142 = scmp.eq.s32.totalorder %s20, 1
    %p143 = por %p141, %p142
    %p144 = scmp.ne.s32.totalorder %s135, %s136
    %p145 = scmp.eq.s32.totalorder %s20, 0
    %p146 = por %p144, %p145
    %p147 = scmp.ne.s32.totalorder %s135, %s136
    %p148 = scmp.eq.s32.totalorder %s21, 1
    %p149 = por %p147, %p148
    %p151 = scmp.ne.s32.totalorder %s136, %s150
    %p152 = scmp.eq.s32.totalorder %s21, 0
    %p153 = por %p151, %p152
    %s155 = sadd.s32 %s154, 1
    %p158 = scmp.eq.s32.totalorder %s15, 1
    %p159 = scmp.ne.s32.totalorder %s154, %s156
    %p160 = scmp.eq.s32.totalorder %s15, 0
    %p161 = por %p159, %p160
    %p162 = scmp.ne.s32.totalorder %s154, %s156
    %p163 = scmp.eq.s32.totalorder %s20, 1
    %p164 = por %p162, %p163
    %p165 = scmp.ne.s32.totalorder %s156, %s157
    %p166 = scmp.eq.s32.totalorder %s20, 0
    %p167 = por %p165, %p166
    %p168 = scmp.ne.s32.totalorder %s156, %s157
    %p169 = scmp.eq.s32.totalorder %s21, 1
    %p170 = por %p168, %p169
    %p172 = scmp.ne.s32.totalorder %s157, %s171
    %p173 = scmp.eq.s32.totalorder %s21, 0
    %p174 = por %p172, %p173
    %s176 = sadd.s32 %s175, 1
    %p179 = scmp.eq.s32.totalorder %s15, 1
    %p180 = scmp.ne.s32.totalorder %s175, %s177
    %p181 = scmp.eq.s32.totalorder %s15, 0
    %p182 = por %p180, %p181
    %p183 = scmp.ne.s32.totalorder %s175, %s177
    %p184 = scmp.eq.s32.totalorder %s20, 1
    %p185 = por %p183, %p184
    %p186 = scmp.ne.s32.totalorder %s177, %s178
    %p187 = scmp.eq.s32.totalorder %s20, 0
    %p188 = por %p186, %p187
    %p189 = scmp.ne.s32.totalorder %s177, %s178
    %p190 = scmp.eq.s32.totalorder %s21, 1
    %p191 = por %p189, %p190
    %p193 = scmp.ne.s32.totalorder %s178, %s192
    %p194 = scmp.eq.s32.totalorder %s21, 0
    %p195 = por %p193, %p194
    %s197 = sadd.s32 %s196, 1
    %p200 = scmp.eq.s32.totalorder %s15, 1
    %p201 = scmp.ne.s32.totalorder %s196, %s198
    %p202 = scmp.eq.s32.totalorder %s15, 0
    %p203 = por %p201, %p202
    %p204 = scmp.ne.s32.totalorder %s196, %s198
    %p205 = scmp.eq.s32.totalorder %s20, 1
    %p206 = por %p204, %p205
    %p207 = scmp.ne.s32.totalorder %s198, %s199
    %p208 = scmp.eq.s32.totalorder %s20, 0
    %p209 = por %p207, %p208
    %p210 = scmp.ne.s32.totalorder %s198, %s199
    %p211 = scmp.eq.s32.totalorder %s21, 1
    %p212 = por %p210, %p211
    %p214 = scmp.ne.s32.totalorder %s199, %s213
    %p215 = scmp.eq.s32.totalorder %s21, 0
    %p216 = por %p214, %p215
    %s217 = ssub.s32 %s15, %s22
    %p218 = scmp.eq.s32.totalorder %s217, 0
    %s220 = sadd.s32 %s219, 1
    %s221 = scalar_select %p218, %s219, %s220
    %p224 = pneg %p218
    %p225 = scmp.eq.s32.totalorder %s15, 1
    %p226 = por %p224, %p225
    %p227 = scmp.ne.s32.totalorder %s219, %s222
    %p228 = scmp.eq.s32.totalorder %s15, 0
    %p229 = por %p227, %p228
    %p230 = scmp.ne.s32.totalorder %s219, %s222
    %p231 = scmp.eq.s32.totalorder %s20, 1
    %p232 = por %p230, %p231
    %p233 = scmp.ne.s32.totalorder %s222, %s223
    %p234 = scmp.eq.s32.totalorder %s20, 0
    %p235 = por %p233, %p234
    %p236 = scmp.ne.s32.totalorder %s222, %s223
    %p237 = scmp.eq.s32.totalorder %s21, 1
    %p238 = por %p236, %p237
    %p240 = scmp.ne.s32.totalorder %s223, %s239
    %p241 = scmp.eq.s32.totalorder %s21, 0
    %p242 = por %p240, %p241
    %p243 = scmp.le.s32.totalorder 1, %s15
    %p244 = scmp.lt.s32.totalorder %s15, 3
    %p245 = pnand %p243, %p244
    %p246 = pneg %p245
    // Predicated region
    $region9: #{attention_stage5_forward.1} parent=5 // pred_check
      _
    $region10: #{attention_stage5_forward.1} parent=5 // pred_check_branch
      %248 = sbr.rel (%p245) target = $region12
    $region11: #{attention_stage5_forward.1} parent=5 // pred_region
      %s249 = ssub.s32 %s15, 1
      // Predicated region
      $region13: #{attention_stage5_forward.1} parent=11 // pred_check
        %p250 = pneg %p62
      $region14: #{attention_stage5_forward.1} parent=11 // pred_check_branch
        %252 = sbr.rel (%p250) target = $region16
      $region15: #{attention_stage5_forward.1} parent=11 // pred_region
        _
      $region16: #{attention_stage5_forward.1} parent=11 // pred_fallthru
        _
      // Predicated region
      $region17: #{attention_stage5_forward.1} parent=11 // pred_check
        %p253 = pneg %p83
      $region18: #{attention_stage5_forward.1} parent=11 // pred_check_branch
        %255 = sbr.rel (%p253) target = $region20
      $region19: #{attention_stage5_forward.1} parent=11 // pred_region
        _
      $region20: #{attention_stage5_forward.1} parent=11 // pred_fallthru
        _
      // Predicated region
      $region21: #{attention_stage5_forward.1} parent=11 // pred_check
        %p256 = pneg %p104
      $region22: #{attention_stage5_forward.1} parent=11 // pred_check_branch
        %258 = sbr.rel (%p256) target = $region24
      $region23: #{attention_stage5_forward.1} parent=11 // pred_region
        _
      $region24: #{attention_stage5_forward.1} parent=11 // pred_fallthru
        _
      // Predicated region
      $region25: #{attention_stage5_forward.1} parent=11 // pred_check
        %p259 = pneg %p125
      $region26: #{attention_stage5_forward.1} parent=11 // pred_check_branch
        %261 = sbr.rel (%p259) target = $region28
      $region27: #{attention_stage5_forward.1} parent=11 // pred_region
        _
      $region28: #{attention_stage5_forward.1} parent=11 // pred_fallthru
        _
      // Predicated region
      $region29: #{attention_stage5_forward.1} parent=11 // pred_check
        %p262 = pneg %p146
      $region30: #{attention_stage5_forward.1} parent=11 // pred_check_branch
        %264 = sbr.rel (%p262) target = $region32
      $region31: #{attention_stage5_forward.1} parent=11 // pred_region
        _
      $region32: #{attention_stage5_forward.1} parent=11 // pred_fallthru
        _
      // Predicated region
      $region33: #{attention_stage5_forward.1} parent=11 // pred_check
        %p265 = pneg %p167
      $region34: #{attention_stage5_forward.1} parent=11 // pred_check_branch
        %267 = sbr.rel (%p265) target = $region36
      $region35: #{attention_stage5_forward.1} parent=11 // pred_region
        _
      $region36: #{attention_stage5_forward.1} parent=11 // pred_fallthru
        _
      // Predicated region
      $region37: #{attention_stage5_forward.1} parent=11 // pred_check
        %p268 = pneg %p188
      $region38: #{attention_stage5_forward.1} parent=11 // pred_check_branch
        %270 = sbr.rel (%p268) target = $region40
      $region39: #{attention_stage5_forward.1} parent=11 // pred_region
        _
      $region40: #{attention_stage5_forward.1} parent=11 // pred_fallthru
        _
      // Predicated region
      $region41: #{attention_stage5_forward.1} parent=11 // pred_check
        %p271 = pneg %p209
      $region42: #{attention_stage5_forward.1} parent=11 // pred_check_branch
        %273 = sbr.rel (%p271) target = $region44
      $region43: #{attention_stage5_forward.1} parent=11 // pred_region
        _
      $region44: #{attention_stage5_forward.1} parent=11 // pred_fallthru
        _
    $region12: #{attention_stage5_forward.1} parent=5 // pred_fallthru
      _
    %p274 = scmp.lt.s32.totalorder %s15, 2
    // Predicated region
    $region45: #{attention_stage5_forward.1} parent=5 // pred_check
      %p275 = pneg %p274
    $region46: #{attention_stage5_forward.1} parent=5 // pred_check_branch
      %277 = sbr.rel (%p275) target = $region48
    $region47: #{attention_stage5_forward.1} parent=5 // pred_region
      // Predicated region
      $region49: #{attention_stage5_forward.1} parent=47 // pred_check
        %p278 = pneg %p35
      $region50: #{attention_stage5_forward.1} parent=47 // pred_check_branch
        %280 = sbr.rel (%p278) target = $region52
      $region51: #{attention_stage5_forward.1} parent=47 // pred_region
        %p281 = scmp.lt.s32.totalorder %s15, 1
        %s282 = scalar_select %p281, %s15, 1
        %s283 = smul.addr %s282, 2
        %s284 = smul.addr %s283, 4
        %s285 = scalar_lea.vmem %s0, %s284
      $region52: #{attention_stage5_forward.1} parent=47 // pred_fallthru
        _
    $region48: #{attention_stage5_forward.1} parent=5 // pred_fallthru
      _
    %p286 = scmp.le.s32.totalorder 1, %s15
    %p287 = scmp.lt.s32.totalorder %s15, 3
    %p288 = pnand %p286, %p287
    %p289 = pneg %p288
    // Predicated region
    $region53: #{attention_stage5_forward.1} parent=5 // pred_check
      _
    $region54: #{attention_stage5_forward.1} parent=5 // pred_check_branch
      %291 = sbr.rel (%p288) target = $region56
    $region55: #{attention_stage5_forward.1} parent=5 // pred_region
      %s292 = ssub.s32 %s15, 1
      %p293 = scmp.lt.s32.totalorder %s20, 1
      %s294 = scalar_select %p293, %s20, 1
      %s295 = smul.addr %s294, 2
      %s296 = smul.addr %s295, 4
      %s297 = scalar_lea.vmem %s0, %s296
      %p298 = pneg %p41
      %p299 = pneg %p38
      %p300 = pneg %p62
      %p301 = pneg %p59
      %p302 = pneg %p83
      %p303 = pneg %p80
      %p304 = pneg %p104
      %p305 = pneg %p101
      %p306 = pneg %p125
      %p307 = pneg %p122
      %p308 = pneg %p146
      %p309 = pneg %p143
      %p310 = pneg %p167
      %p311 = pneg %p164
      %p312 = pneg %p188
      %p313 = pneg %p185
      %p314 = pneg %p209
      %p315 = pneg %p206
      %p316 = pneg %p235
      %p317 = pneg %p232
      %p318 = scmp.lt.s32.totalorder %s20, 1
      %s319 = scalar_select %p318, %s20, 1
      %s320 = smul.addr %s319, 2
      %s321 = smul.addr %s320, 8
      %s322 = scalar_lea.vmem %s9, %s321
      %p323 = scmp.lt.s32.totalorder %s20, 1
      %s324 = scalar_select %p323, %s20, 1
      %s325 = smul.addr %s324, 2
      %s326 = smul.addr %s325, 4
      %s327 = scalar_lea.vmem %s0, %s326
      %p328 = scmp.lt.s32.totalorder %s20, 1
      %s329 = scalar_select %p328, %s20, 1
      %s330 = smul.addr %s329, 2
      %s331 = smul.addr %s330, 8
      %s332 = scalar_lea.vmem %s9, %s331
      %v333 = vlaneseq
      %v334 = vand.u32 %v333, 127
      %v335 = vadd.s32 %v334, 128
      %vm336 = vcmp.lt.s32.totalorder %v334, 0
      %v337 = vsub.s32 0, %v334
      %v338 = vsel %vm336, %v337, %v334
      %v339 = vshrl.u32 %v338, 4
      %v340 = vand.u32 %v338, 15
      %v341 = vsub.s32 0, %v340
      %v342 = vsel %vm336, %v341, %v340
      %vm343 = vcmp.lt.s32.totalorder %v335, 0
      %v344 = vsub.s32 0, %v335
      %v345 = vsel %vm343, %v344, %v335
      %v346 = vshrl.u32 %v345, 4
      %v347 = vand.u32 %v345, 15
      %v348 = vsub.s32 0, %v347
      %v349 = vsel %vm343, %v348, %v347
      %vm350 = vcmp.ne.s32.totalorder %v342, 0
      %vm351 = vcmp.ne.s32.totalorder %v349, 0
      %vm352 = vcmp.lt.s32.totalorder %v342, 0
      %vm353 = vcmp.lt.s32.totalorder %v349, 0
      %vm354 = vmand %vm352, %vm350
      %vm355 = vmand %vm353, %vm351
      %v356 = vadd.s32 %v342, 16
      %v357 = vadd.s32 %v349, 16
      %v358 = vsel %vm354, %v356, %v342
      %v359 = vsel %vm355, %v357, %v349
      %v360 = vld [vmem:[%s327] sm:$0xff]
      %361 = vst [vmem:[#allocation2] sm:$0xff] 0.0
      %vm362 = vcmask 1043456
      %vm363 = vcmask 138244
      %vm364 = vmor %vm363, %vm362
      %365 = vst.msk [vmem:[#allocation2 + $0x8] sm:$0xff] %vm364, 0.0
      %366 = vst [vmem:[#allocation2 + $0x4] sm:$0xff] %v360
      %v367 = vld [vmem:[#allocation2] sm:$0xff]
      %v368 = vld [vmem:[#allocation2 + $0x8] sm:$0xf]
      %v369 = vadd.s32 %v358, 4294967295
      %v370 = vadd.s32 %v359, 4294967295
      %vm371 = vcmp.ge.s32.totalorder %v369, 0
      %vm372 = vcmp.ge.s32.totalorder %v370, 0
      %vm373 = vcmp.lt.s32.totalorder %v369, 16
      %vm374 = vcmp.lt.s32.totalorder %v370, 16
      %vm375 = vmand %vm371, %vm373
      %vm376 = vmand %vm372, %vm374
      %v377 = vsel %vm375, 1, 0
      %v378 = vsel %vm376, 1, 0
      %vm379 = vcmp.eq.s32.totalorder %v377, 1
      %vm380 = vcmp.eq.s32.totalorder %v378, 1
      %v383 = vcombine.high %v367, %v367
      %384 = vrot.lane.b32.xlu0 %v367, 17
      %v385 = vpop.permute.xlu0 %384
      %386 = vrot.lane.b32.xlu0 %v383, 17
      %v387 = vpop.permute.xlu0 %386
      %388 = vrot.lane.b32.xlu0 %v368, 17
      %v389 = vpop.permute.xlu0 %388
      %vm390 = vcmask 138240
      %v391 = vsel %vm390, %v385, %v387
      %v392 = vsel %vm390, %v387, %v389
      %v395 = vsel %vm379, %v391, 0.0
      %v396 = vsel %vm380, %v392, 0.0
      %397 = vst [vmem:[#allocation3] sm:$0xf] %v395
      %398 = vst [vmem:[#allocation3 + $0x8] sm:$0xf] %v396
      %v399 = vld [vmem:[#allocation2] sm:$0xff]
      %v400 = vld [vmem:[#allocation2 + $0x8] sm:$0xf]
      %v403 = vcombine.low %v399, %v399
      %v404 = vcombine.low %v400, %v400
      %405 = vrot.lane.b32.xlu0 %v403, 16
      %v406 = vpop.permute.xlu0 %405
      %407 = vrot.lane.b32.xlu0 %v399, 16
      %v408 = vpop.permute.xlu0 %407
      %409 = vrot.lane.b32.xlu0 %v404, 16
      %v410 = vpop.permute.xlu0 %409
      %vm411 = vcmask 130048
      %v412 = vsel %vm411, %v406, %v408
      %v413 = vsel %vm411, %v408, %v410
      %416 = vst [vmem:[#allocation3] sm:$0xf0] %v412
      %417 = vst [vmem:[#allocation3 + $0x8] sm:$0xf0] %v413
      %v418 = vld [vmem:[#allocation2] sm:$0xff]
      %v419 = vld [vmem:[#allocation2 + $0x8] sm:$0xf]
      %v420 = vadd.s32 %v358, 1
      %v421 = vadd.s32 %v359, 1
      %vm422 = vcmp.ge.s32.totalorder %v420, 0
      %vm423 = vcmp.ge.s32.totalorder %v421, 0
      %vm424 = vcmp.lt.s32.totalorder %v420, 16
      %vm425 = vcmp.lt.s32.totalorder %v421, 16
      %vm426 = vmand %vm422, %vm424
      %vm427 = vmand %vm423, %vm425
      %v428 = vsel %vm426, 1, 0
      %v429 = vsel %vm427, 1, 0
      %vm430 = vcmp.eq.s32.totalorder %v428, 1
      %vm431 = vcmp.eq.s32.totalorder %v429, 1
      %v434 = vcombine.high %v418, %v418
      %435 = vrot.lane.b32.xlu0 %v418, 15
      %v436 = vpop.permute.xlu0 %435
      %437 = vrot.lane.b32.xlu0 %v434, 15
      %v438 = vpop.permute.xlu0 %437
      %439 = vrot.lane.b32.xlu0 %v419, 15
      %v440 = vpop.permute.xlu0 %439
      %vm441 = vcmask 121856
      %v442 = vsel %vm441, %v436, %v438
      %v443 = vsel %vm441, %v438, %v440
      %v446 = vsel %vm430, %v442, 0.0
      %v447 = vsel %vm431, %v443, 0.0
      %448 = vst [vmem:[#allocation3 + $0x10] sm:$0xf] %v446
      %449 = vst [vmem:[#allocation3 + $0x18] sm:$0xf] %v447
      %v450 = vld [vmem:[#allocation2] sm:$0xff]
      %v451 = vld [vmem:[#allocation2 + $0x8] sm:$0xf]
      %v454 = vcombine.high %v450, %v450
      %455 = vrot.lane.b32.xlu0 %v450, 1
      %v456 = vpop.permute.xlu0 %455
      %457 = vrot.lane.b32.xlu0 %v454, 1
      %v458 = vpop.permute.xlu0 %457
      %459 = vrot.lane.b32.xlu0 %v451, 1
      %v460 = vpop.permute.xlu0 %459
      %vm461 = vcmask 7168
      %v462 = vsel %vm461, %v456, %v458
      %v463 = vsel %vm461, %v458, %v460
      %v466 = vsel %vm379, %v462, 0.0
      %v467 = vsel %vm380, %v463, 0.0
      %v470 = vrot.slane %v466, 4
      %v471 = vrot.slane %v467, 4
      %474 = vst [vmem:[#allocation3 + $0x10] sm:$0xf0] %v470
      %475 = vst [vmem:[#allocation3 + $0x18] sm:$0xf0] %v471
      %v476 = vld [vmem:[#allocation2 + $0x4] sm:$0xff]
      %v478 = vcombine.high %v476, %v476
      %480 = vst [vmem:[#allocation3 + $0x20] sm:$0xf] %v476
      %481 = vst [vmem:[#allocation3 + $0x28] sm:$0xf] %v478
      %v482 = vld [vmem:[#allocation2 + $0x4] sm:$0xff]
      %v483 = vld [vmem:[#allocation2 + $0xc] sm:$0xf]
      %v486 = vcombine.high %v482, %v482
      %487 = vrot.lane.b32.xlu0 %v482, 127
      %v488 = vpop.permute.xlu0 %487
      %489 = vrot.lane.b32.xlu0 %v486, 127
      %v490 = vpop.permute.xlu0 %489
      %491 = vrot.lane.b32.xlu0 %v483, 127
      %v492 = vpop.permute.xlu0 %491
      %vm493 = vcmask 1039360
      %v494 = vsel %vm493, %v488, %v490
      %v495 = vsel %vm493, %v490, %v492
      %v498 = vsel %vm430, %v494, 0.0
      %v499 = vsel %vm431, %v495, 0.0
      %v502 = vrot.slane %v498, 4
      %v503 = vrot.slane %v499, 4
      %506 = vst [vmem:[#allocation3 + $0x20] sm:$0xf0] %v502
      %507 = vst [vmem:[#allocation3 + $0x28] sm:$0xf0] %v503
      %v508 = vld [vmem:[#allocation2 + $0x4] sm:$0xff]
      %v509 = vld [vmem:[#allocation2 + $0xc] sm:$0xf]
      %v512 = vcombine.high %v508, %v508
      %513 = vrot.lane.b32.xlu0 %v508, 113
      %v514 = vpop.permute.xlu0 %513
      %515 = vrot.lane.b32.xlu0 %v512, 113
      %v516 = vpop.permute.xlu0 %515
      %517 = vrot.lane.b32.xlu0 %v509, 113
      %v518 = vpop.permute.xlu0 %517
      %vm519 = vcmask 924672
      %v520 = vsel %vm519, %v514, %v516
      %v521 = vsel %vm519, %v516, %v518
      %v524 = vsel %vm379, %v520, 0.0
      %v525 = vsel %vm380, %v521, 0.0
      %526 = vst [vmem:[#allocation3 + $0x30] sm:$0xf] %v524
      %527 = vst [vmem:[#allocation3 + $0x38] sm:$0xf] %v525
      %v528 = vld [vmem:[#allocation2 + $0x4] sm:$0xff]
      %v529 = vld [vmem:[#allocation2 + $0xc] sm:$0xf]
      %v532 = vcombine.low %v528, %v528
      %v533 = vcombine.low %v529, %v529
      %534 = vrot.lane.b32.xlu0 %v532, 112
      %v535 = vpop.permute.xlu0 %534
      %536 = vrot.lane.b32.xlu0 %v528, 112
      %v537 = vpop.permute.xlu0 %536
      %538 = vrot.lane.b32.xlu0 %v533, 112
      %v539 = vpop.permute.xlu0 %538
      %vm540 = vcmask 916480
      %v541 = vsel %vm540, %v535, %v537
      %v542 = vsel %vm540, %v537, %v539
      %545 = vst [vmem:[#allocation3 + $0x30] sm:$0xf0] %v541
      %546 = vst [vmem:[#allocation3 + $0x38] sm:$0xf0] %v542
      %v547 = vld [vmem:[#allocation2 + $0x4] sm:$0xff]
      %v548 = vld [vmem:[#allocation2 + $0xc] sm:$0xf]
      %v551 = vcombine.high %v547, %v547
      %552 = vrot.lane.b32.xlu0 %v547, 111
      %v553 = vpop.permute.xlu0 %552
      %554 = vrot.lane.b32.xlu0 %v551, 111
      %v555 = vpop.permute.xlu0 %554
      %556 = vrot.lane.b32.xlu0 %v548, 111
      %v557 = vpop.permute.xlu0 %556
      %vm558 = vcmask 908288
      %v559 = vsel %vm558, %v553, %v555
      %v560 = vsel %vm558, %v555, %v557
      %v563 = vsel %vm430, %v559, 0.0
      %v564 = vsel %vm431, %v560, 0.0
      %565 = vst [vmem:[#allocation3 + $0x40] sm:$0xf] %v563
      %566 = vst [vmem:[#allocation3 + $0x48] sm:$0xf] %v564
      %v567 = vld [vmem:[#allocation3] sm:$0xff]
      %v568 = vld [vmem:[#allocation3 + $0x8] sm:$0xff]
      %v569 = vld [vmem:[#allocation3 + $0x10] sm:$0xff]
      %v570 = vld [vmem:[#allocation3 + $0x18] sm:$0xff]
      %v571 = vld [vmem:[#allocation3 + $0x20] sm:$0xff]
      %v572 = vld [vmem:[#allocation3 + $0x28] sm:$0xff]
      %v573 = vld [vmem:[#allocation3 + $0x30] sm:$0xff]
      %v574 = vld [vmem:[#allocation3 + $0x38] sm:$0xff]
      %v575 = vld [vmem:[#allocation3 + $0x40] sm:$0xf]
      %v576 = vld [vmem:[#allocation3 + $0x48] sm:$0xf]
      %v577 = vld [vmem:[%s1] sm:$0xff]
      %v578 = vld [vmem:[%s2] sm:$0xff]
      %580 = vset.pattern.permute.xlu0 0
      %581 = vperm.xlu0 %580, %v578
      %v582 = vpop.permute.xlu0 %581
      %vm584 = vcmask 293888
      %v586 = vsel %vm584, %v577, 0
      %v589 = vsel %vm362, %v575, 0
      %v592 = vsel %vm362, %v576, 0
      %594 = vmatprep.subr.mxu0 %v568
      %595 = vmatpush1.msra.mxu0 %v567
      %596 = vmatprep.subr.mxu0 %v570
      %597 = vmatpush1.msra.mxu0 %v569
      %598 = vmatprep.subr.mxu0 %v572
      %599 = vmatpush1.msra.mxu0 %v571
      %600 = vmatprep.subr.mxu0 %v574
      %601 = vmatpush1.msra.mxu0 %v573
      %602 = vmatprep.subr.mxu0 %v592
      %603 = vmatpush1.msra.mxu0 %v589
      %604 = vmatprep.subr.mxu0 0.0
      %605 = vmatpush1.msra.mxu0 0.0
      %606 = vmatprep.subr.mxu0 0.0
      %607 = vmatpush1.msra.mxu0 0.0
      %608 = vmatprep.subr.mxu0 0.0
      %609 = vmatpush1.msra.mxu0 0.0
      %610 = vmatprep.subr.mxu0 0.0
      %611 = vmatpush1.msra.mxu0 0.0
      %612 = vmatprep.subr.mxu0 0.0
      %613 = vmatpush1.msra.mxu0 0.0
      %614 = vmatprep.subr.mxu0 0.0
      %615 = vmatpush1.msra.mxu0 0.0
      %616 = vmatprep.subr.mxu0 0.0
      %617 = vmatpush1.msra.mxu0 0.0
      %618 = vmatprep.subr.mxu0 0.0
      %619 = vmatpush1.msra.mxu0 0.0
      %620 = vmatprep.subr.mxu0 0.0
      %621 = vmatpush1.msra.mxu0 0.0
      %622 = vmatprep.subr.mxu0 0.0
      %623 = vmatpush1.msra.mxu0 0.0
      %624 = vmatprep.subr.mxu0 0.0
      %625 = vmatpush1.msra.mxu0 0.0
      %626 = vmatprep.subr.mxu0 0.0
      %627 = vmatpush1.msra.mxu0 0.0
      %628 = vmatprep.subr.mxu0 0.0
      %629 = vmatpush1.msra.mxu0 0.0
      %630 = vmatprep.subr.mxu0 0.0
      %631 = vmatpush1.msra.mxu0 0.0
      %632 = vmatprep.subr.mxu0 0.0
      %633 = vmatpush1.msra.mxu0 0.0
      %634 = vmatprep.subr.mxu0 0.0
      %635 = vmatpush1.msra.mxu0 0.0
      %636 = vmatprep.subr.mxu0 0.0
      %637 = vmatpush1.msra.mxu0 0.0
      %638 = vmatprep.subr.mxu0 0.0
      %639 = vmatpush1.msra.mxu0 0.0
      %640 = vmatprep.subr.mxu0 0.0
      %641 = vmatpush1.msra.mxu0 0.0
      %642 = vmatprep.subr.mxu0 0.0
      %643 = vmatpush1.msra.mxu0 0.0
      %644 = vmatprep.subr.mxu0 0.0
      %645 = vmatpush1.msra.mxu0 0.0
      %646 = vmatprep.subr.mxu0 0.0
      %647 = vmatpush1.msra.mxu0 0.0
      %648 = vmatprep.subr.mxu0 0.0
      %649 = vmatpush1.msra.mxu0 0.0
      %650 = vmatprep.subr.mxu0 0.0
      %651 = vmatpush1.msra.mxu0 0.0
      %652 = vmatprep.subr.mxu0 0.0
      %653 = vmatpush1.msra.mxu0 0.0
      %654 = vmatprep.subr.mxu0 0.0
      %655 = vmatpush1.msra.mxu0 0.0
      %656 = vmatprep.subr.mxu0 0.0
      %657 = vmatpush1.msra.mxu0 0.0
      %658 = vmatprep.mubr.f32.mxu0 0.0
      %659 = vmatmul.mubr.f32.gmra.mrb[0].mxu0 %v586
      %v660 = vpop.f32.mrb[0].mxu0
      %v661 = vadd.f32 %v582, %v660
      %v662 = vpop.f32.mrb[0].mxu0
      %v663 = vadd.f32 %v582, %v662
      %664 = vdwg.mxu0
      %v665 = vmax.f32 %v661, 0.0
      %v666 = vmax.f32 %v663, 0.0
      %v667 = vld [vmem:[%s3] sm:$0xff]
      %v668 = vld [vmem:[%s4] sm:$0xff]
      %670 = vset.pattern.permute.xlu0 0
      %671 = vperm.xlu0 %670, %v668
      %v672 = vpop.permute.xlu0 %671
      %v675 = vsel %vm584, %v667, 0
      %677 = vmatprep.subr.mxu0 %v568
      %678 = vmatpush1.msra.mxu0 %v567
      %679 = vmatprep.subr.mxu0 %v570
      %680 = vmatpush1.msra.mxu0 %v569
      %681 = vmatprep.subr.mxu0 %v572
      %682 = vmatpush1.msra.mxu0 %v571
      %683 = vmatprep.subr.mxu0 %v574
      %684 = vmatpush1.msra.mxu0 %v573
      %685 = vmatprep.subr.mxu0 %v592
      %686 = vmatpush1.msra.mxu0 %v589
      %687 = vmatprep.subr.mxu0 0.0
      %688 = vmatpush1.msra.mxu0 0.0
      %689 = vmatprep.subr.mxu0 0.0
      %690 = vmatpush1.msra.mxu0 0.0
      %691 = vmatprep.subr.mxu0 0.0
      %692 = vmatpush1.msra.mxu0 0.0
      %693 = vmatprep.subr.mxu0 0.0
      %694 = vmatpush1.msra.mxu0 0.0
      %695 = vmatprep.subr.mxu0 0.0
      %696 = vmatpush1.msra.mxu0 0.0
      %697 = vmatprep.subr.mxu0 0.0
      %698 = vmatpush1.msra.mxu0 0.0
      %699 = vmatprep.subr.mxu0 0.0
      %700 = vmatpush1.msra.mxu0 0.0
      %701 = vmatprep.subr.mxu0 0.0
      %702 = vmatpush1.msra.mxu0 0.0
      %703 = vmatprep.subr.mxu0 0.0
      %704 = vmatpush1.msra.mxu0 0.0
      %705 = vmatprep.subr.mxu0 0.0
      %706 = vmatpush1.msra.mxu0 0.0
      %707 = vmatprep.subr.mxu0 0.0
      %708 = vmatpush1.msra.mxu0 0.0
      %709 = vmatprep.subr.mxu0 0.0
      %710 = vmatpush1.msra.mxu0 0.0
      %711 = vmatprep.subr.mxu0 0.0
      %712 = vmatpush1.msra.mxu0 0.0
      %713 = vmatprep.subr.mxu0 0.0
      %714 = vmatpush1.msra.mxu0 0.0
      %715 = vmatprep.subr.mxu0 0.0
      %716 = vmatpush1.msra.mxu0 0.0
      %717 = vmatprep.subr.mxu0 0.0
      %718 = vmatpush1.msra.mxu0 0.0
      %719 = vmatprep.subr.mxu0 0.0
      %720 = vmatpush1.msra.mxu0 0.0
      %721 = vmatprep.subr.mxu0 0.0
      %722 = vmatpush1.msra.mxu0 0.0
      %723 = vmatprep.subr.mxu0 0.0
      %724 = vmatpush1.msra.mxu0 0.0
      %725 = vmatprep.subr.mxu0 0.0
      %726 = vmatpush1.msra.mxu0 0.0
      %727 = vmatprep.subr.mxu0 0.0
      %728 = vmatpush1.msra.mxu0 0.0
      %729 = vmatprep.subr.mxu0 0.0
      %730 = vmatpush1.msra.mxu0 0.0
      %731 = vmatprep.subr.mxu0 0.0
      %732 = vmatpush1.msra.mxu0 0.0
      %733 = vmatprep.subr.mxu0 0.0
      %734 = vmatpush1.msra.mxu0 0.0
      %735 = vmatprep.subr.mxu0 0.0
      %736 = vmatpush1.msra.mxu0 0.0
      %737 = vmatprep.subr.mxu0 0.0
      %738 = vmatpush1.msra.mxu0 0.0
      %739 = vmatprep.subr.mxu0 0.0
      %740 = vmatpush1.msra.mxu0 0.0
      %741 = vmatprep.mubr.f32.mxu0 0.0
      %742 = vmatmul.mubr.f32.gmra.mrb[0].mxu0 %v675
      %v743 = vpop.f32.mrb[0].mxu0
      %v744 = vadd.f32 %v672, %v743
      %v745 = vpop.f32.mrb[0].mxu0
      %v746 = vadd.f32 %v672, %v745
      %747 = vdwg.mxu0
      %v748 = vmax.f32 %v744, 0.0
      %v749 = vmax.f32 %v746, 0.0
      %750 = vst [vmem:[#allocation4] sm:$0xff] 0.0
      %751 = vst [vmem:[#allocation4 + $0x8] sm:$0xff] 0.0
      %752 = vst [vmem:[#allocation4 + $0x10] sm:$0xff] 0.0
      %753 = vst.msk [vmem:[#allocation4 + $0x18] sm:$0xff] %vm390, 0.0
      %754 = vst [vmem:[#allocation4 + $0x8] sm:$0xff] %v748
      %755 = vst [vmem:[#allocation4 + $0x10] sm:$0xff] %v749
      %v756 = vld [vmem:[#allocation4] sm:$0xff]
      %v757 = vld [vmem:[#allocation4 + $0x8] sm:$0xff]
      %v758 = vld [vmem:[#allocation4 + $0x10] sm:$0xff]
      %762 = vrot.lane.b32.xlu0 %v756, 17
      %v763 = vpop.permute.xlu0 %762
      %764 = vrot.lane.b32.xlu0 %v757, 17
      %v765 = vpop.permute.xlu0 %764
      %766 = vrot.lane.b32.xlu0 %v758, 17
      %v767 = vpop.permute.xlu0 %766
      %v768 = vsel %vm390, %v763, %v765
      %v769 = vsel %vm390, %v765, %v767
      %v772 = vsel %vm379, %v768, 0.0
      %v773 = vsel %vm380, %v769, 0.0
      %774 = vst [vmem:[#allocation5] sm:$0xff] %v772
      %775 = vst [vmem:[#allocation5 + $0x8] sm:$0xff] %v773
      %v776 = vld [vmem:[#allocation4] sm:$0xff]
      %v777 = vld [vmem:[#allocation4 + $0x8] sm:$0xff]
      %v778 = vld [vmem:[#allocation4 + $0x10] sm:$0xff]
      %782 = vrot.lane.b32.xlu0 %v776, 16
      %v783 = vpop.permute.xlu0 %782
      %784 = vrot.lane.b32.xlu0 %v777, 16
      %v785 = vpop.permute.xlu0 %784
      %786 = vrot.lane.b32.xlu0 %v778, 16
      %v787 = vpop.permute.xlu0 %786
      %v788 = vsel %vm411, %v783, %v785
      %v789 = vsel %vm411, %v785, %v787
      %792 = vst [vmem:[#allocation5 + $0x10] sm:$0xff] %v788
      %793 = vst [vmem:[#allocation5 + $0x18] sm:$0xff] %v789
      %v794 = vld [vmem:[#allocation4] sm:$0xff]
      %v795 = vld [vmem:[#allocation4 + $0x8] sm:$0xff]
      %v796 = vld [vmem:[#allocation4 + $0x10] sm:$0xff]
      %800 = vrot.lane.b32.xlu0 %v794, 15
      %v801 = vpop.permute.xlu0 %800
      %802 = vrot.lane.b32.xlu0 %v795, 15
      %v803 = vpop.permute.xlu0 %802
      %804 = vrot.lane.b32.xlu0 %v796, 15
      %v805 = vpop.permute.xlu0 %804
      %v806 = vsel %vm441, %v801, %v803
      %v807 = vsel %vm441, %v803, %v805
      %v810 = vsel %vm430, %v806, 0.0
      %v811 = vsel %vm431, %v807, 0.0
      %812 = vst [vmem:[#allocation5 + $0x20] sm:$0xff] %v810
      %813 = vst [vmem:[#allocation5 + $0x28] sm:$0xff] %v811
      %v814 = vld [vmem:[#allocation4] sm:$0xff]
      %v815 = vld [vmem:[#allocation4 + $0x8] sm:$0xff]
      %v816 = vld [vmem:[#allocation4 + $0x10] sm:$0xff]
      %820 = vrot.lane.b32.xlu0 %v814, 1
      %v821 = vpop.permute.xlu0 %820
      %822 = vrot.lane.b32.xlu0 %v815, 1
      %v823 = vpop.permute.xlu0 %822
      %824 = vrot.lane.b32.xlu0 %v816, 1
      %v825 = vpop.permute.xlu0 %824
      %v826 = vsel %vm461, %v821, %v823
      %v827 = vsel %vm461, %v823, %v825
      %v830 = vsel %vm379, %v826, 0.0
      %v831 = vsel %vm380, %v827, 0.0
      %832 = vst [vmem:[#allocation5 + $0x30] sm:$0xff] %v830
      %833 = vst [vmem:[#allocation5 + $0x38] sm:$0xff] %v831
      %v834 = vld [vmem:[#allocation4 + $0x8] sm:$0xff]
      %v835 = vld [vmem:[#allocation4 + $0x10] sm:$0xff]
      %836 = vst [vmem:[#allocation5 + $0x40] sm:$0xff] %v834
      %837 = vst [vmem:[#allocation5 + $0x48] sm:$0xff] %v835
      %v838 = vld [vmem:[#allocation4 + $0x8] sm:$0xff]
      %v839 = vld [vmem:[#allocation4 + $0x10] sm:$0xff]
      %v840 = vld [vmem:[#allocation4 + $0x18] sm:$0xff]
      %844 = vrot.lane.b32.xlu0 %v838, 127
      %v845 = vpop.permute.xlu0 %844
      %846 = vrot.lane.b32.xlu0 %v839, 127
      %v847 = vpop.permute.xlu0 %846
      %848 = vrot.lane.b32.xlu0 %v840, 127
      %v849 = vpop.permute.xlu0 %848
      %v850 = vsel %vm493, %v845, %v847
      %v851 = vsel %vm493, %v847, %v849
      %v854 = vsel %vm430, %v850, 0.0
      %v855 = vsel %vm431, %v851, 0.0
      %856 = vst [vmem:[#allocation5 + $0x50] sm:$0xff] %v854
      %857 = vst [vmem:[#allocation5 + $0x58] sm:$0xff] %v855
      %v858 = vld [vmem:[#allocation4 + $0x8] sm:$0xff]
      %v859 = vld [vmem:[#allocation4 + $0x10] sm:$0xff]
      %v860 = vld [vmem:[#allocation4 + $0x18] sm:$0xff]
      %864 = vrot.lane.b32.xlu0 %v858, 113
      %v865 = vpop.permute.xlu0 %864
      %866 = vrot.lane.b32.xlu0 %v859, 113
      %v867 = vpop.permute.xlu0 %866
      %868 = vrot.lane.b32.xlu0 %v860, 113
      %v869 = vpop.permute.xlu0 %868
      %v870 = vsel %vm519, %v865, %v867
      %v871 = vsel %vm519, %v867, %v869
      %v874 = vsel %vm379, %v870, 0.0
      %v875 = vsel %vm380, %v871, 0.0
      %876 = vst [vmem:[#allocation5 + $0x60] sm:$0xff] %v874
      %877 = vst [vmem:[#allocation5 + $0x68] sm:$0xff] %v875
      %v878 = vld [vmem:[#allocation4 + $0x8] sm:$0xff]
      %v879 = vld [vmem:[#allocation4 + $0x10] sm:$0xff]
      %v880 = vld [vmem:[#allocation4 + $0x18] sm:$0xff]
      %884 = vrot.lane.b32.xlu0 %v878, 112
      %v885 = vpop.permute.xlu0 %884
      %886 = vrot.lane.b32.xlu0 %v879, 112
      %v887 = vpop.permute.xlu0 %886
      %888 = vrot.lane.b32.xlu0 %v880, 112
      %v889 = vpop.permute.xlu0 %888
      %v890 = vsel %vm540, %v885, %v887
      %v891 = vsel %vm540, %v887, %v889
      %894 = vst [vmem:[#allocation5 + $0x70] sm:$0xff] %v890
      %895 = vst [vmem:[#allocation5 + $0x78] sm:$0xff] %v891
      %v896 = vld [vmem:[#allocation4 + $0x8] sm:$0xff]
      %v897 = vld [vmem:[#allocation4 + $0x10] sm:$0xff]
      %v898 = vld [vmem:[#allocation4 + $0x18] sm:$0xff]
      %902 = vrot.lane.b32.xlu0 %v896, 111
      %v903 = vpop.permute.xlu0 %902
      %904 = vrot.lane.b32.xlu0 %v897, 111
      %v905 = vpop.permute.xlu0 %904
      %906 = vrot.lane.b32.xlu0 %v898, 111
      %v907 = vpop.permute.xlu0 %906
      %v908 = vsel %vm558, %v903, %v905
      %v909 = vsel %vm558, %v905, %v907
      %v912 = vsel %vm430, %v908, 0.0
      %v913 = vsel %vm431, %v909, 0.0
      %914 = vst [vmem:[#allocation5 + $0x80] sm:$0xff] %v912
      %915 = vst [vmem:[#allocation5 + $0x88] sm:$0xff] %v913
      %v916 = vld [vmem:[#allocation5] sm:$0xff]
      %v917 = vld [vmem:[#allocation5 + $0x8] sm:$0xff]
      %v918 = vld [vmem:[#allocation5 + $0x10] sm:$0xff]
      %v919 = vld [vmem:[#allocation5 + $0x18] sm:$0xff]
      %v920 = vld [vmem:[#allocation5 + $0x20] sm:$0xff]
      %v921 = vld [vmem:[#allocation5 + $0x28] sm:$0xff]
      %v922 = vld [vmem:[#allocation5 + $0x30] sm:$0xff]
      %v923 = vld [vmem:[#allocation5 + $0x38] sm:$0xff]
      %v924 = vld [vmem:[#allocation5 + $0x40] sm:$0xff]
      %v925 = vld [vmem:[#allocation5 + $0x48] sm:$0xff]
      %v926 = vld [vmem:[#allocation5 + $0x50] sm:$0xff]
      %v927 = vld [vmem:[#allocation5 + $0x58] sm:$0xff]
      %v928 = vld [vmem:[#allocation5 + $0x60] sm:$0xff]
      %v929 = vld [vmem:[#allocation5 + $0x68] sm:$0xff]
      %v930 = vld [vmem:[#allocation5 + $0x70] sm:$0xff]
      %v931 = vld [vmem:[#allocation5 + $0x78] sm:$0xff]
      %v932 = vld [vmem:[#allocation5 + $0x80] sm:$0xff]
      %v933 = vld [vmem:[#allocation5 + $0x88] sm:$0xff]
      %v934 = vld [vmem:[%s5] sm:$0xff]
      %v935 = vld [vmem:[%s6] sm:$0xff]
      %937 = vset.pattern.permute.xlu0 0
      %938 = vperm.xlu0 %937, %v935
      %v939 = vpop.permute.xlu0 %938
      %vm941 = vcmask 588800
      %v943 = vsel %vm941, %v934, 0
      %945 = vmatprep.subr.mxu0 %v917
      %946 = vmatpush1.msra.mxu0 %v916
      %947 = vmatprep.subr.mxu0 %v919
      %948 = vmatpush1.msra.mxu0 %v918
      %949 = vmatprep.subr.mxu0 %v921
      %950 = vmatpush1.msra.mxu0 %v920
      %951 = vmatprep.subr.mxu0 %v923
      %952 = vmatpush1.msra.mxu0 %v922
      %953 = vmatprep.subr.mxu0 %v925
      %954 = vmatpush1.msra.mxu0 %v924
      %955 = vmatprep.subr.mxu0 %v927
      %956 = vmatpush1.msra.mxu0 %v926
      %957 = vmatprep.subr.mxu0 %v929
      %958 = vmatpush1.msra.mxu0 %v928
      %959 = vmatprep.subr.mxu0 %v931
      %960 = vmatpush1.msra.mxu0 %v930
      %961 = vmatprep.subr.mxu0 %v933
      %962 = vmatpush1.msra.mxu0 %v932
      %963 = vmatprep.subr.mxu0 0.0
      %964 = vmatpush1.msra.mxu0 0.0
      %965 = vmatprep.subr.mxu0 0.0
      %966 = vmatpush1.msra.mxu0 0.0
      %967 = vmatprep.subr.mxu0 0.0
      %968 = vmatpush1.msra.mxu0 0.0
      %969 = vmatprep.subr.mxu0 0.0
      %970 = vmatpush1.msra.mxu0 0.0
      %971 = vmatprep.subr.mxu0 0.0
      %972 = vmatpush1.msra.mxu0 0.0
      %973 = vmatprep.subr.mxu0 0.0
      %974 = vmatpush1.msra.mxu0 0.0
      %975 = vmatprep.subr.mxu0 0.0
      %976 = vmatpush1.msra.mxu0 0.0
      %977 = vmatprep.subr.mxu0 0.0
      %978 = vmatpush1.msra.mxu0 0.0
      %979 = vmatprep.subr.mxu0 0.0
      %980 = vmatpush1.msra.mxu0 0.0
      %981 = vmatprep.subr.mxu0 0.0
      %982 = vmatpush1.msra.mxu0 0.0
      %983 = vmatprep.subr.mxu0 0.0
      %984 = vmatpush1.msra.mxu0 0.0
      %985 = vmatprep.subr.mxu0 0.0
      %986 = vmatpush1.msra.mxu0 0.0
      %987 = vmatprep.subr.mxu0 0.0
      %988 = vmatpush1.msra.mxu0 0.0
      %989 = vmatprep.subr.mxu0 0.0
      %990 = vmatpush1.msra.mxu0 0.0
      %991 = vmatprep.subr.mxu0 0.0
      %992 = vmatpush1.msra.mxu0 0.0
      %993 = vmatprep.subr.mxu0 0.0
      %994 = vmatpush1.msra.mxu0 0.0
      %995 = vmatprep.subr.mxu0 0.0
      %996 = vmatpush1.msra.mxu0 0.0
      %997 = vmatprep.subr.mxu0 0.0
      %998 = vmatpush1.msra.mxu0 0.0
      %999 = vmatprep.subr.mxu0 0.0
      %1000 = vmatpush1.msra.mxu0 0.0
      %1001 = vmatprep.subr.mxu0 0.0
      %1002 = vmatpush1.msra.mxu0 0.0
      %1003 = vmatprep.subr.mxu0 0.0
      %1004 = vmatpush1.msra.mxu0 0.0
      %1005 = vmatprep.subr.mxu0 0.0
      %1006 = vmatpush1.msra.mxu0 0.0
      %1007 = vmatprep.subr.mxu0 0.0
      %1008 = vmatpush1.msra.mxu0 0.0
      %1009 = vmatprep.mubr.f32.mxu0 0.0
      %1010 = vmatmul.mubr.f32.gmra.mrb[0].mxu0 %v943
      %v1011 = vpop.f32.mrb[0].mxu0
      %v1012 = vadd.f32 %v939, %v1011
      %v1013 = vpop.f32.mrb[0].mxu0
      %v1014 = vadd.f32 %v939, %v1013
      %1015 = vdwg.mxu0
      %v1016 = vld [vmem:[%s7] sm:$0xff]
      %v1017 = vld [vmem:[%s8] sm:$0xff]
      %1019 = vset.pattern.permute.xlu0 0
      %1020 = vperm.xlu0 %1019, %v1017
      %v1021 = vpop.permute.xlu0 %1020
      %v1024 = vcombine.high %v360, %v360
      %vm1025 = vcmask 31744
      %v1027 = vsel %vm1025, %v1016, 0
      %v1029 = vsel %vm362, %v360, 0
      %v1031 = vsel %vm362, %v1024, 0
      %1033 = vmatprep.subr.mxu0 %v1031
      %1034 = vmatpush1.msra.mxu0 %v1029
      %1035 = vmatprep.subr.mxu0 0.0
      %1036 = vmatpush1.msra.mxu0 0.0
      %1037 = vmatprep.subr.mxu0 0.0
      %1038 = vmatpush1.msra.mxu0 0.0
      %1039 = vmatprep.subr.mxu0 0.0
      %1040 = vmatpush1.msra.mxu0 0.0
      %1041 = vmatprep.subr.mxu0 0.0
      %1042 = vmatpush1.msra.mxu0 0.0
      %1043 = vmatprep.subr.mxu0 0.0
      %1044 = vmatpush1.msra.mxu0 0.0
      %1045 = vmatprep.subr.mxu0 0.0
      %1046 = vmatpush1.msra.mxu0 0.0
      %1047 = vmatprep.subr.mxu0 0.0
      %1048 = vmatpush1.msra.mxu0 0.0
      %1049 = vmatprep.subr.mxu0 0.0
      %1050 = vmatpush1.msra.mxu0 0.0
      %1051 = vmatprep.subr.mxu0 0.0
      %1052 = vmatpush1.msra.mxu0 0.0
      %1053 = vmatprep.subr.mxu0 0.0
      %1054 = vmatpush1.msra.mxu0 0.0
      %1055 = vmatprep.subr.mxu0 0.0
      %1056 = vmatpush1.msra.mxu0 0.0
      %1057 = vmatprep.subr.mxu0 0.0
      %1058 = vmatpush1.msra.mxu0 0.0
      %1059 = vmatprep.subr.mxu0 0.0
      %1060 = vmatpush1.msra.mxu0 0.0
      %1061 = vmatprep.subr.mxu0 0.0
      %1062 = vmatpush1.msra.mxu0 0.0
      %1063 = vmatprep.subr.mxu0 0.0
      %1064 = vmatpush1.msra.mxu0 0.0
      %1065 = vmatprep.subr.mxu0 0.0
      %1066 = vmatpush1.msra.mxu0 0.0
      %1067 = vmatprep.subr.mxu0 0.0
      %1068 = vmatpush1.msra.mxu0 0.0
      %1069 = vmatprep.subr.mxu0 0.0
      %1070 = vmatpush1.msra.mxu0 0.0
      %1071 = vmatprep.subr.mxu0 0.0
      %1072 = vmatpush1.msra.mxu0 0.0
      %1073 = vmatprep.subr.mxu0 0.0
      %1074 = vmatpush1.msra.mxu0 0.0
      %1075 = vmatprep.subr.mxu0 0.0
      %1076 = vmatpush1.msra.mxu0 0.0
      %1077 = vmatprep.subr.mxu0 0.0
      %1078 = vmatpush1.msra.mxu0 0.0
      %1079 = vmatprep.subr.mxu0 0.0
      %1080 = vmatpush1.msra.mxu0 0.0
      %1081 = vmatprep.subr.mxu0 0.0
      %1082 = vmatpush1.msra.mxu0 0.0
      %1083 = vmatprep.subr.mxu0 0.0
      %1084 = vmatpush1.msra.mxu0 0.0
      %1085 = vmatprep.subr.mxu0 0.0
      %1086 = vmatpush1.msra.mxu0 0.0
      %1087 = vmatprep.subr.mxu0 0.0
      %1088 = vmatpush1.msra.mxu0 0.0
      %1089 = vmatprep.subr.mxu0 0.0
      %1090 = vmatpush1.msra.mxu0 0.0
      %1091 = vmatprep.subr.mxu0 0.0
      %1092 = vmatpush1.msra.mxu0 0.0
      %1093 = vmatprep.subr.mxu0 0.0
      %1094 = vmatpush1.msra.mxu0 0.0
      %1095 = vmatprep.subr.mxu0 0.0
      %1096 = vmatpush1.msra.mxu0 0.0
      %1097 = vmatprep.mubr.f32.mxu0 0.0
      %1098 = vmatmul.mubr.f32.gmra.mrb[0].mxu0 %v1027
      %v1099 = vpop.f32.mrb[0].mxu0
      %v1100 = vadd.f32 %v1021, %v1099
      %v1101 = vpop.f32.mrb[0].mxu0
      %v1102 = vadd.f32 %v1021, %v1101
      %1103 = vdwg.mxu0
      %v1104 = vadd.f32 %v1012, %v1100
      %v1105 = vadd.f32 %v1014, %v1102
      %v1106 = vxor.u32 %v1104, 2147483648
      %v1107 = vxor.u32 %v1105, 2147483648
      %v1108 = vmul.f32 %v1106, 1.442695
      %v1109 = vpow.pop %v1108
      %v1110 = vmul.f32 %v1107, 1.442695
      %v1111 = vpow.pop %v1110
      %v1112 = vadd.f32 %v1109, 1.0
      %v1113 = vadd.f32 %v1111, 1.0
      %v1114 = vrcp.pop %v1112
      %v1115 = vmul.f32 1.0, %v1114
      %v1116 = vrcp.pop %v1113
      %v1117 = vmul.f32 1.0, %v1116
      %v1118 = vadd.f32 %v1115, 1.0
      %v1119 = vadd.f32 %v1117, 1.0
      %v1120 = vmul.f32 %v1118, %v665
      %v1121 = vmul.f32 %v1119, %v666
      %1122 = vst [vmem:[%s332] sm:$0xff] %v1120
      %1123 = vst [vmem:[%s332 + $0x8] sm:$0xff] %v1121
      %p1124 = scmp.lt.s32.totalorder %s20, 1
      %s1125 = scalar_select %p1124, %s20, 1
      %s1126 = smul.addr %s1125, 2
      %s1127 = smul.addr %s1126, 8
      %s1128 = scalar_lea.vmem %s9, %s1127
      // Predicated region
      $region57: #{attention_stage5_forward.1} parent=55 // pred_check
        %p1129 = pneg %p232
      $region58: #{attention_stage5_forward.1} parent=55 // pred_check_branch
        %1131 = sbr.rel (%p1129) target = $region60
      $region59: #{attention_stage5_forward.1} parent=55 // pred_region
        _
      $region60: #{attention_stage5_forward.1} parent=55 // pred_fallthru
        _
    $region56: #{attention_stage5_forward.1} parent=5 // pred_fallthru
      _
    %p1132 = scmp.le.s32.totalorder 2, %s15
    // Predicated region
    $region61: #{attention_stage5_forward.1} parent=5 // pred_check
      %p1133 = pneg %p1132
    $region62: #{attention_stage5_forward.1} parent=5 // pred_check_branch
      %1135 = sbr.rel (%p1133) target = $region64
    $region63: #{attention_stage5_forward.1} parent=5 // pred_region
      %s1136 = ssub.s32 %s15, 2
      // Predicated region
      $region65: #{attention_stage5_forward.1} parent=63 // pred_check
        %p1137 = pneg %p238
      $region66: #{attention_stage5_forward.1} parent=63 // pred_check_branch
        %1139 = sbr.rel (%p1137) target = $region68
      $region67: #{attention_stage5_forward.1} parent=63 // pred_region
        %p1140 = scmp.lt.s32.totalorder %s21, 1
        %s1141 = scalar_select %p1140, %s21, 1
        %s1142 = smul.addr %s1141, 2
        %s1143 = smul.addr %s1142, 8
        %s1144 = scalar_lea.vmem %s9, %s1143
      $region68: #{attention_stage5_forward.1} parent=63 // pred_fallthru
        _
    $region64: #{attention_stage5_forward.1} parent=5 // pred_fallthru
      _
  $region6: #{attention_stage5_forward.1} parent=0 // loop_footer
    %s19 = sadd.s32 1, %s15
  $region7: #{attention_stage5_forward.1} parent=0 // loop_footer_branch
    %14 = sbr.rel target = $region3
  $region8: #{attention_stage5_forward.1} parent=0 // loop_exit
    _

</llo_original>
